<compile_context>
chip_gen: v5e
topology: v5e:2x2
jax: 0.10.0
libtpu: 0.0.40
codegen_flags: <defaults>
</compile_context>

<pallas_src>
import functools

import jax
import jax.numpy as jnp
from jax import lax
from jax.experimental import pallas as pl
from jax.experimental.pallas import tpu as pltpu


def _round_up(x, m):
    return ((x + m - 1) // m) * m


# -----------------------------------------------------------------------------
# Kernel-side helpers
# -----------------------------------------------------------------------------
def _cheb_stash(K, L2, t0, t_ref, C):
    """Write T_1..T_{K-1} (bf16) into t_ref column blocks [k*C:(k+1)*C].

    T_0 must already sit in block 0.  L2 = 2*L_hat, so
        T_1 = 0.5 * (L2 @ T_0)   (exact power-of-2 scale of the f32 accumulator)
        T_k = L2 @ T_{k-1} - T_{k-2}
    MXU operands are bf16; accumulation and the subtract are f32.
    """
    if K > 1:
        t1 = (0.5 * jnp.dot(L2, t0, preferred_element_type=jnp.float32)
              ).astype(jnp.bfloat16)
        t_ref[:, C:2 * C] = t1
        t_km2, t_km1 = t0, t1
        for k in range(2, K):
            tk = (jnp.dot(L2, t_km1, preferred_element_type=jnp.float32)
                  - t_km2.astype(jnp.float32)).astype(jnp.bfloat16)
            t_ref[:, k * C:(k + 1) * C] = tk
            t_km2, t_km1 = t_km1, tk


def _gru_cell(K, fin_p, fout_p, L2, X, H, wc_ref, whh_ref, b_ref, t_ref, th_ref):
    """One GConvGRU step.

    L2 [N,N] bf16 (= 2*L_hat), X [N,fin_p] bf16, H [N,fout_p] f32.
    t_ref  [N, K*(fin_p+fout_p)] bf16 scratch: Chebyshev basis of M = [X | H].
    th_ref [N, K*fout_p]         bf16 scratch: Chebyshev basis of H*R.
    Feature dims are padded to multiples of 128, so every slice below is a
    whole lane block (unmasked loads/stores, no intra-vreg selects).
    """
    C = fin_p + fout_p

    # T_0 = [X | H] written straight into the bf16 basis stash.
    t_ref[:, :fin_p] = X.astype(jnp.bfloat16)
    t_ref[:, fin_p:C] = H.astype(jnp.bfloat16)
    _cheb_stash(K, L2, t_ref[:, :C], t_ref, C)

    # One wide, lane-dense matmul for all gates and all Chebyshev orders:
    #   [N, K*C] @ [K*C, 3*fout_p], columns = (z | r | candidate x-side).
    pre = jnp.dot(t_ref[...], wc_ref[...],
                  preferred_element_type=jnp.float32) + b_ref[...]
    Z = jax.nn.sigmoid(pre[:, :fout_p])
    R = jax.nn.sigmoid(pre[:, fout_p:2 * fout_p])

    # Candidate h-side needs its own basis (its input H*R depends on R).
    HR = (H * R).astype(jnp.bfloat16)
    th_ref[:, :fout_p] = HR
    _cheb_stash(K, L2, HR, th_ref, fout_p)
    cand = jnp.dot(th_ref[...], whh_ref[...], preferred_element_type=jnp.float32)

    H_tilde = jnp.tanh(pre[:, 2 * fout_p:] + cand)
    return Z * H + (1.0 - Z) * H_tilde


def _gru_step_kernel(K, fin_p, fout_p, l2_ref, x_ref, h_ref, wc_ref, whh_ref,
                     b_ref, out_ref, t_ref, th_ref):
    out_ref[...] = _gru_cell(K, fin_p, fout_p, l2_ref[...], x_ref[...],
                             h_ref[...], wc_ref, whh_ref, b_ref, t_ref, th_ref)


def _gru_seq_kernel(K, fin_p, fout_p, l2_hbm, x_ref, h0_ref, wc_ref, whh_ref,
                    b_ref, out_ref, l2_vmem, l2_sem, h_carry, t_ref, th_ref):
    t = pl.program_id(0)

    @pl.when(t == 0)
    def _():
        # Single-buffered residency for the N^2 term: DMA L2 from HBM into one
        # VMEM scratch copy, reused by every time step.
        cp = pltpu.make_async_copy(l2_hbm, l2_vmem, l2_sem.at[0])
        cp.start()
        cp.wait()
        h_carry[...] = h0_ref[...]

    h_new = _gru_cell(K, fin_p, fout_p, l2_vmem[...], x_ref[0], h_carry[...],
                      wc_ref, whh_ref, b_ref, t_ref, th_ref)
    h_carry[...] = h_new
    out_ref[0] = h_new


# -----------------------------------------------------------------------------
# Wrappers
# -----------------------------------------------------------------------------
def _pad2(a, rows, cols, dtype):
    """Zero-pad the last two dims of `a` to (rows, cols) and cast."""
    out = jnp.zeros(a.shape[:-2] + (rows, cols), dtype)
    return out.at[..., :a.shape[-2], :a.shape[-1]].set(a.astype(dtype))


def _vmem_limit_bytes(n_p, K, fin_p, fout_p):
    """Explicit scoped-VMEM request (never below the 32 MiB default).

    Grows with N so larger graphs stay whole-L-resident on v5e/v6e (128 MiB
    physical).  On v7x (64 MiB physical) very large graphs need the row-tiled
    path instead (see TODO at the top of the file)."""
    bf16, f32 = 2, 4
    C = fin_p + fout_p
    resident = (n_p * n_p * bf16                      # L2 VMEM scratch (1 copy)
                + 2 * n_p * fout_p * f32              # h0 (double-buffered)
                + 2 * K * C * 3 * fout_p * bf16       # wc
                + 2 * K * fout_p * fout_p * bf16      # whh
                + 2 * 3 * fout_p * f32                # b
                + 2 * n_p * fin_p * bf16              # X_t stream
                + 2 * n_p * fout_p * f32              # H_t stream
                + n_p * fout_p * f32                  # hidden-state carry
                + n_p * K * C * bf16                  # [X|H] basis stash
                + n_p * K * fout_p * bf16)            # H*R basis stash
    return int(max(resident + (4 << 20), 32 << 20))


def prepare_gconv_gru(lhat, wx, wh, bx, bh, lane=128, sublane=8):
    """One-time packing/padding, hoisted out of the per-call path.

    wx [3,K,Fin,Fout] (z,r,h x-side), wh [3,K,Fout,Fout] (z,r,h h-side),
    bx/bh [3,Fout].  Returns the params tuple consumed by the call wrappers.
    """
    K = int(wx.shape[1])
    fin, fout = int(wx.shape[2]), int(wx.shape[3])
    n = int(lhat.shape[0])
    n_p = _round_up(n, sublane)
    fin_p, fout_p = _round_up(fin, lane), _round_up(fout, lane)
    C = fin_p + fout_p

    # L2 = 2*L_hat as bf16 (power-of-2 scale => exactly 2*bf16(L_hat)); padded
    # node rows/cols are zero so they never leak into real rows.
    l2 = jnp.zeros((n_p, n_p), jnp.float32).at[:n, :n].set(2.0 * lhat)
    l2 = l2.astype(jnp.bfloat16)

    # Gate-stacked, lane-padded weights: row blocks = K x [x-rows | h-rows],
    # column blocks = (z | r | candidate x-side).  Candidate h-rows are zero —
    # that block is applied to H*R via whh instead (small MXU-flop waste, but
    # it keeps everything in one wide contraction).
    wc = jnp.zeros((K, C, 3 * fout_p), jnp.float32)
    for g in range(3):                                    # x-side: z, r, cand
        wc = wc.at[:, :fin, g * fout_p:g * fout_p + fout].set(wx[g])
    for g in range(2):                                    # h-side: z, r only
        wc = wc.at[:, fin_p:fin_p + fout, g * fout_p:g * fout_p + fout].set(wh[g])
    wc = wc.reshape(K * C, 3 * fout_p).astype(jnp.bfloat16)

    whh = jnp.zeros((K, fout_p, fout_p), jnp.float32)
    whh = whh.at[:, :fout, :fout].set(wh[2])
    whh = whh.reshape(K * fout_p, fout_p).astype(jnp.bfloat16)

    b = jnp.zeros((1, 3 * fout_p), jnp.float32)
    for g in range(3):
        b = b.at[0, g * fout_p:g * fout_p + fout].set(bx[g] + bh[g])

    meta = dict(K=K, n=n, n_p=n_p, fin=fin, fout=fout,
                fin_p=fin_p, fout_p=fout_p)
    return l2, wc, whh, b, meta


def gconv_gru_pallas(params, x, h):
    """Single GConvGRU step (== the PyTorch module's forward). Returns [N, Fout] f32."""
    l2, wc, whh, b, m = params
    K, n, n_p = m["K"], m["n"], m["n_p"]
    fin_p, fout_p, fout = m["fin_p"], m["fout_p"], m["fout"]
    C = fin_p + fout_p

    x_p = _pad2(x, n_p, fin_p, jnp.bfloat16)
    h_p = _pad2(h, n_p, fout_p, jnp.float32)

    kernel = functools.partial(_gru_step_kernel, K, fin_p, fout_p)
    out = pl.pallas_call(
        kernel,
        out_shape=jax.ShapeDtypeStruct((n_p, fout_p), jnp.float32),
        scratch_shapes=[pltpu.VMEM((n_p, K * C), jnp.bfloat16),
                        pltpu.VMEM((n_p, K * fout_p), jnp.bfloat16)],
        # h_p is a wrapper-local temp, so aliasing it to the output never
        # donates a caller-visible buffer.
        input_output_aliases={2: 0},
        compiler_params=pltpu.CompilerParams(
            vmem_limit_bytes=_vmem_limit_bytes(n_p, K, fin_p, fout_p)),
    )(l2, x_p, h_p, wc, whh, b)
    return out[:n, :fout]


def gconv_gru_sequence_pallas(params, xs, h0):
    """Apply the GConvGRU cell over xs [T,N,Fin] in ONE pallas_call.

    grid=(T,): L2 DMA'd once into VMEM, packed weights/h0 resident, X_t
    streamed in, H_t streamed out, hidden state carried in a VMEM scratch."""
    l2, wc, whh, b, m = params
    K, n, n_p = m["K"], m["n"], m["n_p"]
    fin_p, fout_p, fout = m["fin_p"], m["fout_p"], m["fout"]
    C = fin_p + fout_p
    t_steps = int(xs.shape[0])

    xs_p = _pad2(xs, n_p, fin_p, jnp.bfloat16)          # [T, n_p, fin_p] bf16
    h0_p = _pad2(h0, n_p, fout_p, jnp.float32)

    flops_per_step = (2 * n_p * n_p * (K - 1) * (C + fout_p)   # recurrences
                      + 2 * n_p * (K * C) * (3 * fout_p)        # fused gate matmul
                      + 2 * n_p * (K * fout_p) * fout_p         # candidate matmul
                      + 10 * n_p * fout_p)                      # gating VPU work
    cost = pl.CostEstimate(
        flops=int(t_steps * flops_per_step),
        transcendentals=int(t_steps * 3 * n_p * fout_p),
        bytes_accessed=int(l2.size * 2 + wc.size * 2 + whh.size * 2
                           + b.size * 4 + h0_p.size * 4 + xs_p.size * 2
                           + t_steps * n_p * fout_p * 4))

    kernel = functools.partial(_gru_seq_kernel, K, fin_p, fout_p)
    out = pl.pallas_call(
        kernel,
        out_shape=jax.ShapeDtypeStruct((t_steps, n_p, fout_p), jnp.float32),
        grid=(t_steps,),
        in_specs=[
            pl.BlockSpec(memory_space=pl.ANY),                    # L2: raw HBM
            pl.BlockSpec((1, n_p, fin_p), lambda t: (t, 0, 0)),   # X_t: streamed
            pl.BlockSpec((n_p, fout_p), lambda t: (0, 0)),        # h0: resident
            pl.BlockSpec((K * C, 3 * fout_p), lambda t: (0, 0)),  # wc: resident
            pl.BlockSpec((K * fout_p, fout_p), lambda t: (0, 0)), # whh: resident
            pl.BlockSpec((1, 3 * fout_p), lambda t: (0, 0)),      # b: resident
        ],
        out_specs=pl.BlockSpec((1, n_p, fout_p), lambda t: (t, 0, 0)),
        scratch_shapes=[
            pltpu.VMEM((n_p, n_p), jnp.bfloat16),        # L2 (single VMEM copy)
            pltpu.SemaphoreType.DMA((1,)),               # its DMA semaphore
            pltpu.VMEM((n_p, fout_p), jnp.float32),      # hidden-state carry
            pltpu.VMEM((n_p, K * C), jnp.bfloat16),      # basis of [X|H]
            pltpu.VMEM((n_p, K * fout_p), jnp.bfloat16), # basis of H*R
        ],
        compiler_params=pltpu.CompilerParams(
            dimension_semantics=("arbitrary",),          # h_t depends on h_{t-1}
            vmem_limit_bytes=_vmem_limit_bytes(n_p, K, fin_p, fout_p)),
        cost_estimate=cost,
    )(l2, xs_p, h0_p, wc, whh, b)
    return out[:, :n, :fout]


# -----------------------------------------------------------------------------
# Plain-JAX glue: densify edge_index/edge_weight into the scaled Laplacian.
# -----------------------------------------------------------------------------
def dense_scaled_laplacian(edge_index, edge_weight, num_nodes):
    """'sym' normalization, lambda_max = 2.0 (PyG ChebConv default for 'sym'):
       L_hat = 2*L/lambda_max - I = -D^{-1/2} A D^{-1/2}  (zero diagonal)."""
    # TODO(synk): only 'sym' normalization with the default lambda_max handled.
    src, dst = edge_index[0], edge_index[1]
    deg = jnp.zeros((num_nodes,), jnp.float32).at[src].add(edge_weight)
    dinv = jnp.where(deg > 0, 1.0 / jnp.sqrt(deg), 0.0)
    norm = -dinv[src] * edge_weight * dinv[dst]
    lhat = jnp.zeros((num_nodes, num_nodes), jnp.float32).at[dst, src].add(norm)
    return lhat


# -----------------------------------------------------------------------------
# Pure-JAX references.  mm_dtype=float32  -> exact module semantics.
#                       mm_dtype=bfloat16 -> the kernel's precision policy
#                       (bf16 MXU operands / T_k storage, f32 accum & gating).
# -----------------------------------------------------------------------------
def _cheb_ref(lhat, m, w, b, mm_dtype):
    K = w.shape[0]
    hp = lax.Precision.HIGHEST
    lap = lhat.astype(mm_dtype)
    w = w.astype(mm_dtype)
    ts = [m.astype(mm_dtype)]
    if K > 1:
        ts.append(jnp.dot(lap, ts[0], precision=hp,
                          preferred_element_type=jnp.float32).astype(mm_dtype))
    for _ in range(2, K):
        t = (2.0 * jnp.dot(lap, ts[-1], precision=hp,
                           preferred_element_type=jnp.float32)
             - ts[-2].astype(jnp.float32)).astype(mm_dtype)
        ts.append(t)
    acc = sum(jnp.dot(ts[k], w[k], precision=hp,
                      preferred_element_type=jnp.float32) for k in range(K))
    return acc + b


def gconv_gru_ref(lhat, x, h, wx, wh, bx, bh, mm_dtype=jnp.float32):
    Z = jax.nn.sigmoid(_cheb_ref(lhat, x, wx[0], bx[0], mm_dtype) +
                       _cheb_ref(lhat, h, wh[0], bh[0], mm_dtype))
    R = jax.nn.sigmoid(_cheb_ref(lhat, x, wx[1], bx[1], mm_dtype) +
                       _cheb_ref(lhat, h, wh[1], bh[1], mm_dtype))
    Ht = jnp.tanh(_cheb_ref(lhat, x, wx[2], bx[2], mm_dtype) +
                  _cheb_ref(lhat, h * R, wh[2], bh[2], mm_dtype))
    return Z * h + (1.0 - Z) * Ht


def gconv_gru_seq_ref(lhat, xs, h0, wx, wh, bx, bh, mm_dtype=jnp.float32):
    h = h0
    outs = []
    for t in range(xs.shape[0]):
        h = gconv_gru_ref(lhat, xs[t], h, wx, wh, bx, bh, mm_dtype)
        outs.append(h)
    return jnp.stack(outs)


# -----------------------------------------------------------------------------
# Main
# -----------------------------------------------------------------------------
if __name__ == "__main__":
    key = jax.random.PRNGKey(0)
    N, F_IN, F_OUT, K, T = 16, 4, 32, 3, 8

    # Undirected ring graph (both directions), positive symmetric edge weights.
    s = jnp.arange(N, dtype=jnp.int32)
    d = (s + 1) % N
    edge_index = jnp.stack([jnp.concatenate([s, d]), jnp.concatenate([d, s])])
    key, kw = jax.random.split(key)
    w_half = jax.random.uniform(kw, (N,), jnp.float32, 0.5, 1.5)
    edge_weight = jnp.concatenate([w_half, w_half])

    # Node-feature sequence and initial hidden state.
    key, kx, kh = jax.random.split(key, 3)
    Xs = jax.random.normal(kx, (T, N, F_IN), jnp.float32)
    H0 = jax.random.normal(kh, (N, F_OUT), jnp.float32)

    # Parameters of the six ChebConvs, stacked as (z, r, h).
    key, k1, k2, k3, k4 = jax.random.split(key, 5)
    wx = jax.random.normal(k1, (3, K, F_IN, F_OUT), jnp.float32) \
        * jnp.sqrt(2.0 / (F_IN + F_OUT))
    wh = jax.random.normal(k2, (3, K, F_OUT, F_OUT), jnp.float32) \
        * jnp.sqrt(2.0 / (2 * F_OUT))
    bx = 0.01 * jax.random.normal(k3, (3, F_OUT), jnp.float32)
    bh = 0.01 * jax.random.normal(k4, (3, F_OUT), jnp.float32)

    lhat = dense_scaled_laplacian(edge_index, edge_weight, N)

    # One-time packing / padding (hoisted out of the per-call path).
    params = prepare_gconv_gru(lhat, wx, wh, bx, bh)

    # References.
    step_ref_f32 = gconv_gru_ref(lhat, Xs[0], H0, wx, wh, bx, bh, jnp.float32)
    step_ref_bf16 = gconv_gru_ref(lhat, Xs[0], H0, wx, wh, bx, bh, jnp.bfloat16)
    seq_ref_f32 = gconv_gru_seq_ref(lhat, Xs, H0, wx, wh, bx, bh, jnp.float32)
    seq_ref_bf16 = gconv_gru_seq_ref(lhat, Xs, H0, wx, wh, bx, bh, jnp.bfloat16)

    # Fused multi-step kernel (L2 DMA'd once, weights resident, grid=(T,)).
    h_seq = gconv_gru_sequence_pallas(params, Xs, H0)
    # Single-step kernel (plain whole-array pallas_call, no grid machinery).
    h_step = gconv_gru_pallas(params, Xs[0], H0)
    jax.block_until_ready((h_seq, h_step))

    assert h_step.shape == (N, F_OUT) and h_seq.shape == (T, N, F_OUT)
    # Tight check vs a reference using the same precision policy
    # (bf16 MXU operands, f32 accumulation & gating).
    assert jnp.allclose(h_step, step_ref_bf16, rtol=1e-2, atol=1e-2), \
        f"step vs bf16 ref: {jnp.max(jnp.abs(h_step - step_ref_bf16))}"
    assert jnp.allclose(h_seq, seq_ref_bf16, rtol=2e-2, atol=2e-2), \
        f"seq vs bf16 ref: {jnp.max(jnp.abs(h_seq - seq_ref_bf16))}"
    # Loose sanity check vs the exact f32 module semantics (bf16 MXU operands
    # trade a little precision for ~2x MXU throughput + half the L footprint).
    assert jnp.allclose(h_step, step_ref_f32, rtol=1e-1, atol=1e-1), \
        f"step vs f32 ref: {jnp.max(jnp.abs(h_step - step_ref_f32))}"
    assert jnp.allclose(h_seq, seq_ref_f32, rtol=1e-1, atol=2.5e-1), \
        f"seq vs f32 ref: {jnp.max(jnp.abs(h_seq - seq_ref_f32))}"

    print("KERNEL_OK")
</pallas_src>

<mosaic_0001>
module attributes {stable_mosaic.version = 11 : i64} {
  func.func @_gru_seq_kernel(%arg0: i32, %arg1: memref<16x16xbf16, #tpu.memory_space<any>>, %arg2: memref<1x16x128xbf16, #tpu.memory_space<vmem>>, %arg3: memref<16x128xf32, #tpu.memory_space<vmem>>, %arg4: memref<768x384xbf16, #tpu.memory_space<vmem>>, %arg5: memref<384x128xbf16, #tpu.memory_space<vmem>>, %arg6: memref<1x384xf32, #tpu.memory_space<vmem>>, %arg7: memref<1x16x128xf32, #tpu.memory_space<vmem>>, %arg8: memref<16x16xbf16, #tpu.memory_space<vmem>>, %arg9: memref<1x!tpu.dma_semaphore, #tpu.memory_space<semaphore_mem>>, %arg10: memref<16x128xf32, #tpu.memory_space<vmem>>, %arg11: memref<16x768xbf16, #tpu.memory_space<vmem>>, %arg12: memref<16x384xbf16, #tpu.memory_space<vmem>>) attributes {dimension_semantics = [#tpu.dimension_semantics<arbitrary>], iteration_bounds = array<i64: 8>, scalar_prefetch = 0 : i64, scratch_operands = 5 : i64, tpu.core_type = #tpu.core_type<tc>, window_params = [{}, {transform_indices = @transform_1, window_bounds = array<i64: 1, 16, 128>}, {pipeline_mode = #tpu.pipeline_mode<synchronous>, transform_indices = @transform_2, window_bounds = array<i64: 16, 128>}, {pipeline_mode = #tpu.pipeline_mode<synchronous>, transform_indices = @transform_3, window_bounds = array<i64: 768, 384>}, {pipeline_mode = #tpu.pipeline_mode<synchronous>, transform_indices = @transform_4, window_bounds = array<i64: 384, 128>}, {pipeline_mode = #tpu.pipeline_mode<synchronous>, transform_indices = @transform_5, window_bounds = array<i64: 1, 384>}, {transform_indices = @transform_6, window_bounds = array<i64: 1, 16, 128>}]} {
    %c0_i32 = arith.constant 0 : i32
    %0 = arith.cmpi eq, %arg0, %c0_i32 : i32
    %1 = arith.extui %0 : i1 to i32
    %c0_i32_0 = arith.constant 0 : i32
    %2 = arith.cmpi ne, %1, %c0_i32_0 : i32
    scf.if %2 {
      %c0_i32_45 = arith.constant 0 : i32
      %67 = tpu.memref_slice %arg9[%c0_i32_45] : memref<1x!tpu.dma_semaphore, #tpu.memory_space<semaphore_mem>> -> memref<1x!tpu.dma_semaphore, #tpu.memory_space<semaphore_mem>>
      %68 = tpu.memref_squeeze %67 : memref<1x!tpu.dma_semaphore, #tpu.memory_space<semaphore_mem>> -> memref<!tpu.dma_semaphore, #tpu.memory_space<semaphore_mem>>
      tpu.enqueue_dma source(%arg1 : memref<16x16xbf16, #tpu.memory_space<any>>) target(%arg8 : memref<16x16xbf16, #tpu.memory_space<vmem>>) target_semaphore(%68 : memref<!tpu.dma_semaphore, #tpu.memory_space<semaphore_mem>>)
      %c0_i32_46 = arith.constant 0 : i32
      %69 = tpu.memref_slice %arg9[%c0_i32_46] : memref<1x!tpu.dma_semaphore, #tpu.memory_space<semaphore_mem>> -> memref<1x!tpu.dma_semaphore, #tpu.memory_space<semaphore_mem>>
      %70 = tpu.memref_squeeze %69 : memref<1x!tpu.dma_semaphore, #tpu.memory_space<semaphore_mem>> -> memref<!tpu.dma_semaphore, #tpu.memory_space<semaphore_mem>>
      tpu.wait_dma2 semaphore(%70 : memref<!tpu.dma_semaphore, #tpu.memory_space<semaphore_mem>>) src(%arg1 : memref<16x16xbf16, #tpu.memory_space<any>>) dst(%arg8 : memref<16x16xbf16, #tpu.memory_space<vmem>>)
      %c0_47 = arith.constant 0 : index
      %c0_48 = arith.constant 0 : index
      %71 = vector.load %arg3[%c0_47, %c0_48] : memref<16x128xf32, #tpu.memory_space<vmem>>, vector<16x128xf32>
      %c0_49 = arith.constant 0 : index
      %c0_50 = arith.constant 0 : index
      %72 = vector.load %arg10[%c0_49, %c0_50] : memref<16x128xf32, #tpu.memory_space<vmem>>, vector<16x128xf32>
      tpu.vector_store %arg10[%c0_49, %c0_50], %71 {strides = array<i32>} : memref<16x128xf32, #tpu.memory_space<vmem>>, vector<16x128xf32>,
    } else {
    }
    %c0 = arith.constant 0 : index
    %c0_1 = arith.constant 0 : index
    %3 = vector.load %arg8[%c0, %c0_1] : memref<16x16xbf16, #tpu.memory_space<vmem>>, vector<16x16xbf16>
    %c0_2 = arith.constant 0 : index
    %c0_3 = arith.constant 0 : index
    %c0_4 = arith.constant 0 : index
    %4 = vector.load %arg2[%c0_2, %c0_3, %c0_4] : memref<1x16x128xbf16, #tpu.memory_space<vmem>>, vector<1x16x128xbf16>
    %5 = vector.shape_cast %4 : vector<1x16x128xbf16> to vector<16x128xbf16>
    %c0_5 = arith.constant 0 : index
    %c0_6 = arith.constant 0 : index
    %6 = vector.load %arg10[%c0_5, %c0_6] : memref<16x128xf32, #tpu.memory_space<vmem>>, vector<16x128xf32>
    %c0_7 = arith.constant 0 : index
    %c0_8 = arith.constant 0 : index
    %7 = vector.load %arg11[%c0_7, %c0_8] : memref<16x768xbf16, #tpu.memory_space<vmem>>, vector<16x128xbf16>
    tpu.vector_store %arg11[%c0_7, %c0_8], %5 {strides = array<i32>} : memref<16x768xbf16, #tpu.memory_space<vmem>>, vector<16x128xbf16>,
    %8 = arith.truncf %6 : vector<16x128xf32> to vector<16x128xbf16>
    %c0_9 = arith.constant 0 : index
    %c128 = arith.constant 128 : index
    %9 = vector.load %arg11[%c0_9, %c128] : memref<16x768xbf16, #tpu.memory_space<vmem>>, vector<16x128xbf16>
    tpu.vector_store %arg11[%c0_9, %c128], %8 {strides = array<i32>} : memref<16x768xbf16, #tpu.memory_space<vmem>>, vector<16x128xbf16>,
    %c0_10 = arith.constant 0 : index
    %c0_11 = arith.constant 0 : index
    %10 = vector.load %arg11[%c0_10, %c0_11] : memref<16x768xbf16, #tpu.memory_space<vmem>>, vector<16x256xbf16>
    %cst = arith.constant dense<0.000000e+00> : vector<16x256xf32>
    %11 = tpu.matmul %3, %10, %cst {dimension_numbers = #tpu.dot_dimension_numbers<[1], [0], [0], [1], [0, 0, 1, 1], [], []>} : vector<16x16xbf16>, vector<16x256xbf16>, vector<16x256xf32> -> vector<16x256xf32>
    %cst_12 = arith.constant 5.000000e-01 : f32
    %12 = vector.broadcast %cst_12 : f32 to vector<16x256xf32>
    %13 = arith.mulf %12, %11 : vector<16x256xf32>
    %14 = arith.truncf %13 : vector<16x256xf32> to vector<16x256xbf16>
    %c0_13 = arith.constant 0 : index
    %c256 = arith.constant 256 : index
    %15 = vector.load %arg11[%c0_13, %c256] : memref<16x768xbf16, #tpu.memory_space<vmem>>, vector<16x256xbf16>
    tpu.vector_store %arg11[%c0_13, %c256], %14 {strides = array<i32>} : memref<16x768xbf16, #tpu.memory_space<vmem>>, vector<16x256xbf16>,
    %cst_14 = arith.constant dense<0.000000e+00> : vector<16x256xf32>
    %16 = tpu.matmul %3, %14, %cst_14 {dimension_numbers = #tpu.dot_dimension_numbers<[1], [0], [0], [1], [0, 0, 1, 1], [], []>} : vector<16x16xbf16>, vector<16x256xbf16>, vector<16x256xf32> -> vector<16x256xf32>
    %17 = arith.extf %10 : vector<16x256xbf16> to vector<16x256xf32>
    %18 = arith.subf %16, %17 : vector<16x256xf32>
    %19 = arith.truncf %18 : vector<16x256xf32> to vector<16x256xbf16>
    %c0_15 = arith.constant 0 : index
    %c512 = arith.constant 512 : index
    %20 = vector.load %arg11[%c0_15, %c512] : memref<16x768xbf16, #tpu.memory_space<vmem>>, vector<16x256xbf16>
    tpu.vector_store %arg11[%c0_15, %c512], %19 {strides = array<i32>} : memref<16x768xbf16, #tpu.memory_space<vmem>>, vector<16x256xbf16>,
    %c0_16 = arith.constant 0 : index
    %c0_17 = arith.constant 0 : index
    %21 = vector.load %arg11[%c0_16, %c0_17] : memref<16x768xbf16, #tpu.memory_space<vmem>>, vector<16x768xbf16>
    %c0_18 = arith.constant 0 : index
    %c0_19 = arith.constant 0 : index
    %22 = vector.load %arg4[%c0_18, %c0_19] : memref<768x384xbf16, #tpu.memory_space<vmem>>, vector<768x384xbf16>
    %cst_20 = arith.constant dense<0.000000e+00> : vector<16x384xf32>
    %23 = tpu.matmul %21, %22, %cst_20 {dimension_numbers = #tpu.dot_dimension_numbers<[1], [0], [0], [1], [0, 0, 1, 1], [], []>} : vector<16x768xbf16>, vector<768x384xbf16>, vector<16x384xf32> -> vector<16x384xf32>
    %c0_21 = arith.constant 0 : index
    %c0_22 = arith.constant 0 : index
    %24 = vector.load %arg6[%c0_21, %c0_22] : memref<1x384xf32, #tpu.memory_space<vmem>>, vector<1x384xf32>
    %25 = vector.broadcast %24 : vector<1x384xf32> to vector<16x384xf32>
    %26 = arith.addf %23, %25 : vector<16x384xf32>
    %27 = vector.extract_strided_slice %26 {offsets = [0, 0], sizes = [16, 128], strides = [1, 1]} : vector<16x384xf32> to vector<16x128xf32>
    %28 = arith.negf %27 : vector<16x128xf32>
    %29 = math.exp %28 : vector<16x128xf32>
    %cst_23 = arith.constant 1.000000e+00 : f32
    %30 = vector.broadcast %cst_23 : f32 to vector<16x128xf32>
    %31 = arith.addf %30, %29 : vector<16x128xf32>
    %32 = arith.divf %30, %31 : vector<16x128xf32>
    %33 = vector.extract_strided_slice %26 {offsets = [0, 128], sizes = [16, 128], strides = [1, 1]} : vector<16x384xf32> to vector<16x128xf32>
    %34 = arith.negf %33 : vector<16x128xf32>
    %35 = math.exp %34 : vector<16x128xf32>
    %cst_24 = arith.constant 1.000000e+00 : f32
    %36 = vector.broadcast %cst_24 : f32 to vector<16x128xf32>
    %37 = arith.addf %36, %35 : vector<16x128xf32>
    %38 = arith.divf %36, %37 : vector<16x128xf32>
    %39 = arith.mulf %6, %38 : vector<16x128xf32>
    %40 = arith.truncf %39 : vector<16x128xf32> to vector<16x128xbf16>
    %c0_25 = arith.constant 0 : index
    %c0_26 = arith.constant 0 : index
    %41 = vector.load %arg12[%c0_25, %c0_26] : memref<16x384xbf16, #tpu.memory_space<vmem>>, vector<16x128xbf16>
    tpu.vector_store %arg12[%c0_25, %c0_26], %40 {strides = array<i32>} : memref<16x384xbf16, #tpu.memory_space<vmem>>, vector<16x128xbf16>,
    %cst_27 = arith.constant dense<0.000000e+00> : vector<16x128xf32>
    %42 = tpu.matmul %3, %40, %cst_27 {dimension_numbers = #tpu.dot_dimension_numbers<[1], [0], [0], [1], [0, 0, 1, 1], [], []>} : vector<16x16xbf16>, vector<16x128xbf16>, vector<16x128xf32> -> vector<16x128xf32>
    %cst_28 = arith.constant 5.000000e-01 : f32
    %43 = vector.broadcast %cst_28 : f32 to vector<16x128xf32>
    %44 = arith.mulf %43, %42 : vector<16x128xf32>
    %45 = arith.truncf %44 : vector<16x128xf32> to vector<16x128xbf16>
    %c0_29 = arith.constant 0 : index
    %c128_30 = arith.constant 128 : index
    %46 = vector.load %arg12[%c0_29, %c128_30] : memref<16x384xbf16, #tpu.memory_space<vmem>>, vector<16x128xbf16>
    tpu.vector_store %arg12[%c0_29, %c128_30], %45 {strides = array<i32>} : memref<16x384xbf16, #tpu.memory_space<vmem>>, vector<16x128xbf16>,
    %cst_31 = arith.constant dense<0.000000e+00> : vector<16x128xf32>
    %47 = tpu.matmul %3, %45, %cst_31 {dimension_numbers = #tpu.dot_dimension_numbers<[1], [0], [0], [1], [0, 0, 1, 1], [], []>} : vector<16x16xbf16>, vector<16x128xbf16>, vector<16x128xf32> -> vector<16x128xf32>
    %48 = arith.extf %40 : vector<16x128xbf16> to vector<16x128xf32>
    %49 = arith.subf %47, %48 : vector<16x128xf32>
    %50 = arith.truncf %49 : vector<16x128xf32> to vector<16x128xbf16>
    %c0_32 = arith.constant 0 : index
    %c256_33 = arith.constant 256 : index
    %51 = vector.load %arg12[%c0_32, %c256_33] : memref<16x384xbf16, #tpu.memory_space<vmem>>, vector<16x128xbf16>
    tpu.vector_store %arg12[%c0_32, %c256_33], %50 {strides = array<i32>} : memref<16x384xbf16, #tpu.memory_space<vmem>>, vector<16x128xbf16>,
    %c0_34 = arith.constant 0 : index
    %c0_35 = arith.constant 0 : index
    %52 = vector.load %arg12[%c0_34, %c0_35] : memref<16x384xbf16, #tpu.memory_space<vmem>>, vector<16x384xbf16>
    %c0_36 = arith.constant 0 : index
    %c0_37 = arith.constant 0 : index
    %53 = vector.load %arg5[%c0_36, %c0_37] : memref<384x128xbf16, #tpu.memory_space<vmem>>, vector<384x128xbf16>
    %cst_38 = arith.constant dense<0.000000e+00> : vector<16x128xf32>
    %54 = tpu.matmul %52, %53, %cst_38 {dimension_numbers = #tpu.dot_dimension_numbers<[1], [0], [0], [1], [0, 0, 1, 1], [], []>} : vector<16x384xbf16>, vector<384x128xbf16>, vector<16x128xf32> -> vector<16x128xf32>
    %55 = vector.extract_strided_slice %26 {offsets = [0, 256], sizes = [16, 128], strides = [1, 1]} : vector<16x384xf32> to vector<16x128xf32>
    %56 = arith.addf %55, %54 : vector<16x128xf32>
    %57 = math.tanh %56 : vector<16x128xf32>
    %58 = arith.mulf %32, %6 : vector<16x128xf32>
    %cst_39 = arith.constant 1.000000e+00 : f32
    %59 = vector.broadcast %cst_39 : f32 to vector<16x128xf32>
    %60 = arith.subf %59, %32 : vector<16x128xf32>
    %61 = arith.mulf %60, %57 : vector<16x128xf32>
    %62 = arith.addf %58, %61 : vector<16x128xf32>
    %c0_40 = arith.constant 0 : index
    %c0_41 = arith.constant 0 : index
    %63 = vector.load %arg10[%c0_40, %c0_41] : memref<16x128xf32, #tpu.memory_space<vmem>>, vector<16x128xf32>
    tpu.vector_store %arg10[%c0_40, %c0_41], %62 {strides = array<i32>} : memref<16x128xf32, #tpu.memory_space<vmem>>, vector<16x128xf32>,
    %c0_42 = arith.constant 0 : index
    %c0_43 = arith.constant 0 : index
    %c0_44 = arith.constant 0 : index
    %64 = vector.load %arg7[%c0_42, %c0_43, %c0_44] : memref<1x16x128xf32, #tpu.memory_space<vmem>>, vector<1x16x128xf32>
    %65 = vector.shape_cast %64 : vector<1x16x128xf32> to vector<16x128xf32>
    %66 = vector.shape_cast %62 : vector<16x128xf32> to vector<1x16x128xf32>
    tpu.vector_store %arg7[%c0_42, %c0_43, %c0_44], %66 {strides = array<i32>} : memref<1x16x128xf32, #tpu.memory_space<vmem>>, vector<1x16x128xf32>,
    return
  }
  func.func @transform_1(%arg0: i32) -> (i32, i32, i32) {
    %c0_i32 = arith.constant 0 : i32
    %c0_i32_0 = arith.constant 0 : i32
    %c0_i32_1 = arith.constant 0 : i32
    return %arg0, %c0_i32, %c0_i32_0 : i32, i32, i32
  }
  func.func @transform_2(%arg0: i32) -> (i32, i32) {
    %c0_i32 = arith.constant 0 : i32
    %c0_i32_0 = arith.constant 0 : i32
    %c0_i32_1 = arith.constant 0 : i32
    return %c0_i32, %c0_i32_0 : i32, i32
  }
  func.func @transform_3(%arg0: i32) -> (i32, i32) {
    %c0_i32 = arith.constant 0 : i32
    %c0_i32_0 = arith.constant 0 : i32
    %c0_i32_1 = arith.constant 0 : i32
    return %c0_i32, %c0_i32_0 : i32, i32
  }
  func.func @transform_4(%arg0: i32) -> (i32, i32) {
    %c0_i32 = arith.constant 0 : i32
    %c0_i32_0 = arith.constant 0 : i32
    %c0_i32_1 = arith.constant 0 : i32
    return %c0_i32, %c0_i32_0 : i32, i32
  }
  func.func @transform_5(%arg0: i32) -> (i32, i32) {
    %c0_i32 = arith.constant 0 : i32
    %c0_i32_0 = arith.constant 0 : i32
    %c0_i32_1 = arith.constant 0 : i32
    return %c0_i32, %c0_i32_0 : i32, i32
  }
  func.func @transform_6(%arg0: i32) -> (i32, i32, i32) {
    %c0_i32 = arith.constant 0 : i32
    %c0_i32_0 = arith.constant 0 : i32
    %c0_i32_1 = arith.constant 0 : i32
    return %arg0, %c0_i32, %c0_i32_0 : i32, i32, i32
  }
}

</mosaic_0001>

<llo_original>
// kernel: tpu_custom_call.1
$region0: #{tpu_custom_call.1}
  #allocation0 [shape = 'u32[]', space=smem, size = 0x4, offset = 0x4, fixed_abs, tag = 'smem constant byte address 0x4 - core index']
  #allocation1 [shape = 'u32[72,128]{1,0:T(1,128)}', space=vmem, size = 0x9000, scoped, tag = 'internal scratch']
  #allocation2 [shape = 'bf16[16,16]{1,0:T(8,128)(2,1)}', space=vmem, size = 0x1000, scoped, tag = 'scratch operand']
  #allocation3 [shape = 's32[1]{0}', space=sflag, size = 0x4, scoped, tag = 'scratch operand']
  #allocation4 [shape = 'f32[16,128]{1,0:T(8,128)}', space=vmem, size = 0x2000, scoped, tag = 'scratch operand']
  #allocation5 [shape = 'bf16[16,768]{1,0:T(8,128)(2,1)}', space=vmem, size = 0x6000, scoped, tag = 'scratch operand']
  #allocation6 [shape = 'bf16[16,384]{1,0:T(8,128)(2,1)}', space=vmem, size = 0x3000, scoped, tag = 'scratch operand']
  #allocation16 [shape = 's32[]', space=sflag, size = 0x4, offset = 0, fixed_abs, tag = 'sflag constant byte address 0x0 - dummy sync flag']
  #allocation17 [shape = 's32[]', space=sflag, size = 0x4, offset = 0, fixed_abs, tag = 'sflag constant byte address 0x0 - dummy sync flag']
  #allocation18 [shape = 'u32[]', space=smem, size = 0x4, offset = 0x44, fixed_abs, tag = 'smem constant byte address 0x44 - assertion arg 0']
  #allocation19 [shape = 'u32[]', space=smem, size = 0x4, offset = 0x48, fixed_abs, tag = 'smem constant byte address 0x48 - assertion arg 1']
  %s0 = inlined_call_operand.hbm [shape: bf16[16,16], index: 0, kind: input, shape index: {}]
  %s1 = inlined_call_operand.hbm [shape: bf16[8,16,128], index: 1, kind: input, shape index: {}]
  %s2 = inlined_call_operand.hbm [shape: f32[16,128], index: 2, kind: input, shape index: {}]
  %s3 = inlined_call_operand.hbm [shape: bf16[768,384], index: 3, kind: input, shape index: {}]
  %s4 = inlined_call_operand.hbm [shape: bf16[384,128], index: 4, kind: input, shape index: {}]
  %s5 = inlined_call_operand.vmem [shape: f32[1,384], index: 5, kind: input, shape index: {}]
  %s6 = inlined_call_operand.hbm [shape: f32[8,16,128], index: 6, kind: output, shape index: {}]
  %s7 = sld [smem:[#allocation0]]
  $region77: #{tpu_custom_call.1} parent=0
    _
  %s9 = ssub.s32 1, %s7
  %s10 = scalar_select 0, %s9, %s7
  $region1: #{tpu_custom_call.1} parent=0
    #allocation7 [shape = 'u8[8192]{0}', space=vmem, size = 0x2000, scoped, tag = 'input window, operand 1']
    #allocation8 [shape = 's32[2]{0}', space=sflag, size = 0x8, scoped, tag = 'scoped memory for tpu_custom_call.1']
    #allocation9 [shape = 's32[2]{0}', space=sflag, size = 0x8, scoped, tag = 'scoped memory for tpu_custom_call.1']
    #allocation10 [shape = 'u8[8192]{0}', space=vmem, size = 0x2000, scoped, tag = 'input window, operand 2, single buffered']
    #allocation11 [shape = 's32[1]{0}', space=sflag, size = 0x4, scoped, tag = 'scoped memory for tpu_custom_call.1']
    #allocation12 [shape = 'u8[589824]{0}', space=vmem, size = 0x90000, scoped, tag = 'input window, operand 3, single buffered']
    #allocation13 [shape = 'u8[98304]{0}', space=vmem, size = 0x18000, scoped, tag = 'input window, operand 4, single buffered']
    #allocation14 [shape = 's32[1]{0}', space=sflag, size = 0x4, scoped, tag = 'scoped memory for tpu_custom_call.1']
    #allocation15 [shape = 'u8[16384]{0}', space=vmem, size = 0x4000, scoped, tag = 'output window, operand 0']
    %11 = vsyncpa [#allocation8], 0
    %s12 = scalar_lea.sflag [#allocation8], 1
    %13 = vsyncpa %s12, 0
    %14 = vsyncpa [#allocation11], 0
    %15 = vsyncpa [#allocation14], 0
    %16 = vsyncpa [#allocation9], 0
    %s17 = scalar_lea.sflag [#allocation9], 1
    %18 = vsyncpa %s17, 0
    loop: start=0, step=1, limit=10
    $region2: #{tpu_custom_call.1} parent=1 // loop_pre_header
      _
    $region3: #{tpu_custom_call.1} parent=1 // loop_header
      %s20 = sphi 0, %s24
      %p21 = scmp.ge.s32.totalorder %s20, 10
      %s30 = sphi 0, %s32
      %s33 = sphi 0, %s30
      %s34 = sphi 0, %s33
      %s50 = sphi 0, %s34
      %s54 = sphi 0, %s54
      %s56 = sphi 0, %s54
      %s57 = sphi 0, %s56
      %s71 = sphi 0, %s57
      %s75 = sphi 0, %s75
      %s77 = sphi 0, %s75
      %s78 = sphi 0, %s77
      %s92 = sphi 0, %s78
      %s96 = sphi 0, %s96
      %s98 = sphi 0, %s96
      %s99 = sphi 0, %s98
      %s113 = sphi 0, %s99
      %s117 = sphi 0, %s117
      %s119 = sphi 0, %s117
      %s120 = sphi 0, %s119
      %s134 = sphi 0, %s120
      %s140 = sphi 0, %s142
      %s143 = sphi 0, %s140
      %s144 = sphi 0, %s143
      %s160 = sphi 0, %s144
    $region4: #{tpu_custom_call.1} parent=1 // loop_header_branch
      %23 = sbr.rel (%p21) target = $region8
    $region5: #{tpu_custom_call.1} parent=1 // loop_body
      %s25 = ssub.s32 %s20, 1
      %s26 = ssub.s32 %s20, 2
      %s27 = sadd.s32 %s20, 1
      %s28 = ssub.s32 %s20, %s27
      %p29 = scmp.eq.s32.totalorder %s28, 0
      %s31 = sadd.s32 %s30, 1
      %s32 = scalar_select %p29, %s30, %s31
      %p35 = pneg %p29
      %p36 = scmp.eq.s32.totalorder %s20, 7
      %p37 = por %p35, %p36
      %p38 = scmp.ne.s32.totalorder %s30, %s33
      %p39 = scmp.eq.s32.totalorder %s20, 0
      %p40 = por %p38, %p39
      %p41 = scmp.ne.s32.totalorder %s30, %s33
      %p42 = scmp.eq.s32.totalorder %s25, 7
      %p43 = por %p41, %p42
      %p44 = scmp.ne.s32.totalorder %s33, %s34
      %p45 = scmp.eq.s32.totalorder %s25, 0
      %p46 = por %p44, %p45
      %p47 = scmp.ne.s32.totalorder %s33, %s34
      %p48 = scmp.eq.s32.totalorder %s26, 7
      %p49 = por %p47, %p48
      %p51 = scmp.ne.s32.totalorder %s34, %s50
      %p52 = scmp.eq.s32.totalorder %s26, 0
      %p53 = por %p51, %p52
      %s55 = sadd.s32 %s54, 1
      %p58 = scmp.eq.s32.totalorder %s20, 7
      %p59 = scmp.ne.s32.totalorder %s54, %s56
      %p60 = scmp.eq.s32.totalorder %s20, 0
      %p61 = por %p59, %p60
      %p62 = scmp.ne.s32.totalorder %s54, %s56
      %p63 = scmp.eq.s32.totalorder %s25, 7
      %p64 = por %p62, %p63
      %p65 = scmp.ne.s32.totalorder %s56, %s57
      %p66 = scmp.eq.s32.totalorder %s25, 0
      %p67 = por %p65, %p66
      %p68 = scmp.ne.s32.totalorder %s56, %s57
      %p69 = scmp.eq.s32.totalorder %s26, 7
      %p70 = por %p68, %p69
      %p72 = scmp.ne.s32.totalorder %s57, %s71
      %p73 = scmp.eq.s32.totalorder %s26, 0
      %p74 = por %p72, %p73
      %s76 = sadd.s32 %s75, 1
      %p79 = scmp.eq.s32.totalorder %s20, 7
      %p80 = scmp.ne.s32.totalorder %s75, %s77
      %p81 = scmp.eq.s32.totalorder %s20, 0
      %p82 = por %p80, %p81
      %p83 = scmp.ne.s32.totalorder %s75, %s77
      %p84 = scmp.eq.s32.totalorder %s25, 7
      %p85 = por %p83, %p84
      %p86 = scmp.ne.s32.totalorder %s77, %s78
      %p87 = scmp.eq.s32.totalorder %s25, 0
      %p88 = por %p86, %p87
      %p89 = scmp.ne.s32.totalorder %s77, %s78
      %p90 = scmp.eq.s32.totalorder %s26, 7
      %p91 = por %p89, %p90
      %p93 = scmp.ne.s32.totalorder %s78, %s92
      %p94 = scmp.eq.s32.totalorder %s26, 0
      %p95 = por %p93, %p94
      %s97 = sadd.s32 %s96, 1
      %p100 = scmp.eq.s32.totalorder %s20, 7
      %p101 = scmp.ne.s32.totalorder %s96, %s98
      %p102 = scmp.eq.s32.totalorder %s20, 0
      %p103 = por %p101, %p102
      %p104 = scmp.ne.s32.totalorder %s96, %s98
      %p105 = scmp.eq.s32.totalorder %s25, 7
      %p106 = por %p104, %p105
      %p107 = scmp.ne.s32.totalorder %s98, %s99
      %p108 = scmp.eq.s32.totalorder %s25, 0
      %p109 = por %p107, %p108
      %p110 = scmp.ne.s32.totalorder %s98, %s99
      %p111 = scmp.eq.s32.totalorder %s26, 7
      %p112 = por %p110, %p111
      %p114 = scmp.ne.s32.totalorder %s99, %s113
      %p115 = scmp.eq.s32.totalorder %s26, 0
      %p116 = por %p114, %p115
      %s118 = sadd.s32 %s117, 1
      %p121 = scmp.eq.s32.totalorder %s20, 7
      %p122 = scmp.ne.s32.totalorder %s117, %s119
      %p123 = scmp.eq.s32.totalorder %s20, 0
      %p124 = por %p122, %p123
      %p125 = scmp.ne.s32.totalorder %s117, %s119
      %p126 = scmp.eq.s32.totalorder %s25, 7
      %p127 = por %p125, %p126
      %p128 = scmp.ne.s32.totalorder %s119, %s120
      %p129 = scmp.eq.s32.totalorder %s25, 0
      %p130 = por %p128, %p129
      %p131 = scmp.ne.s32.totalorder %s119, %s120
      %p132 = scmp.eq.s32.totalorder %s26, 7
      %p133 = por %p131, %p132
      %p135 = scmp.ne.s32.totalorder %s120, %s134
      %p136 = scmp.eq.s32.totalorder %s26, 0
      %p137 = por %p135, %p136
      %s138 = ssub.s32 %s20, %s27
      %p139 = scmp.eq.s32.totalorder %s138, 0
      %s141 = sadd.s32 %s140, 1
      %s142 = scalar_select %p139, %s140, %s141
      %p145 = pneg %p139
      %p146 = scmp.eq.s32.totalorder %s20, 7
      %p147 = por %p145, %p146
      %p148 = scmp.ne.s32.totalorder %s140, %s143
      %p149 = scmp.eq.s32.totalorder %s20, 0
      %p150 = por %p148, %p149
      %p151 = scmp.ne.s32.totalorder %s140, %s143
      %p152 = scmp.eq.s32.totalorder %s25, 7
      %p153 = por %p151, %p152
      %p154 = scmp.ne.s32.totalorder %s143, %s144
      %p155 = scmp.eq.s32.totalorder %s25, 0
      %p156 = por %p154, %p155
      %p157 = scmp.ne.s32.totalorder %s143, %s144
      %p158 = scmp.eq.s32.totalorder %s26, 7
      %p159 = por %p157, %p158
      %p161 = scmp.ne.s32.totalorder %s144, %s160
      %p162 = scmp.eq.s32.totalorder %s26, 0
      %p163 = por %p161, %p162
      %p164 = scmp.le.s32.totalorder 1, %s20
      %p165 = scmp.lt.s32.totalorder %s20, 9
      %p166 = pnand %p164, %p165
      %p167 = pneg %p166
      // Predicated region
      $region9: #{tpu_custom_call.1} parent=5 // pred_check
        _
      $region10: #{tpu_custom_call.1} parent=5 // pred_check_branch
        %169 = sbr.rel (%p166) target = $region12
      $region11: #{tpu_custom_call.1} parent=5 // pred_region
        %s170 = ssub.s32 %s20, 1
        // Predicated region
        $region13: #{tpu_custom_call.1} parent=11 // pred_check
          %p171 = pneg %p67
        $region14: #{tpu_custom_call.1} parent=11 // pred_check_branch
          %173 = sbr.rel (%p171) target = $region16
        $region15: #{tpu_custom_call.1} parent=11 // pred_region
          %175 = vsyncadd [#allocation11], 0
          %s176 = sshll.u32 %s2, 4
          %s177 = int_to_ptr.hbm [resolvable:$true] %s176
          %s178 = sshll.u32 [#allocation10], 4
          %s179 = int_to_ptr.vmem [resolvable:$true] %s178
          %184 = dma.hbm_to_vmem [thread:$0]  %s177, 256, %s179, [#allocation11], 128, 128, 8
        $region16: #{tpu_custom_call.1} parent=11 // pred_fallthru
          _
        // Predicated region
        $region17: #{tpu_custom_call.1} parent=11 // pred_check
          %p185 = pneg %p88
        $region18: #{tpu_custom_call.1} parent=11 // pred_check_branch
          %187 = sbr.rel (%p185) target = $region20
        $region19: #{tpu_custom_call.1} parent=11 // pred_region
          %189 = vsyncadd [#allocation11], 0
          %s190 = sshll.u32 %s3, 4
          %s191 = int_to_ptr.hbm [resolvable:$true] %s190
          %s192 = sshll.u32 [#allocation12], 4
          %s193 = int_to_ptr.vmem [resolvable:$true] %s192
          %198 = dma.hbm_to_vmem [thread:$0]  %s191, 18432, %s193, [#allocation11], 192, 192, 12
        $region20: #{tpu_custom_call.1} parent=11 // pred_fallthru
          _
        // Predicated region
        $region21: #{tpu_custom_call.1} parent=11 // pred_check
          %p199 = pneg %p109
        $region22: #{tpu_custom_call.1} parent=11 // pred_check_branch
          %201 = sbr.rel (%p199) target = $region24
        $region23: #{tpu_custom_call.1} parent=11 // pred_region
          %203 = vsyncadd [#allocation14], 0
          %s204 = sshll.u32 %s4, 4
          %s205 = int_to_ptr.hbm [resolvable:$true] %s204
          %s206 = sshll.u32 [#allocation13], 4
          %s207 = int_to_ptr.vmem [resolvable:$true] %s206
          %212 = dma.hbm_to_vmem [thread:$0]  %s205, 3072, %s207, [#allocation14], 64, 64, 4
        $region24: #{tpu_custom_call.1} parent=11 // pred_fallthru
          _
        // Predicated region
        $region25: #{tpu_custom_call.1} parent=11 // pred_check
          %p213 = pneg %p130
        $region26: #{tpu_custom_call.1} parent=11 // pred_check_branch
          %215 = sbr.rel (%p213) target = $region28
        $region27: #{tpu_custom_call.1} parent=11 // pred_region
          _
        $region28: #{tpu_custom_call.1} parent=11 // pred_fallthru
          _
      $region12: #{tpu_custom_call.1} parent=5 // pred_fallthru
        _
      %p216 = scmp.lt.s32.totalorder %s20, 8
      // Predicated region
      $region29: #{tpu_custom_call.1} parent=5 // pred_check
        %p217 = pneg %p216
      $region30: #{tpu_custom_call.1} parent=5 // pred_check_branch
        %219 = sbr.rel (%p217) target = $region32
      $region31: #{tpu_custom_call.1} parent=5 // pred_region
        // Predicated region
        $region33: #{tpu_custom_call.1} parent=31 // pred_check
          %p220 = pneg %p40
        $region34: #{tpu_custom_call.1} parent=31 // pred_check_branch
          %222 = sbr.rel (%p220) target = $region36
        $region35: #{tpu_custom_call.1} parent=31 // pred_region
          %s223 = sand.u32 %s30, 1
          %s224 = scalar_lea.sflag [#allocation8], %s223
          %s225 = sand.u32 %s30, 1
          %s226 = smul.addr %s225, 8
          %s227 = scalar_lea.vmem [#allocation7], %s226
          %229 = vsyncadd %s224, 0
          %s230 = smul.addr %s20, 2
          %s231 = smul.addr %s230, 4
          %s232 = scalar_lea.hbm %s1, %s231
          %s233 = sshll.u32 %s232, 4
          %s234 = int_to_ptr.hbm [resolvable:$true] %s233
          %s235 = sshll.u32 %s227, 4
          %s236 = int_to_ptr.vmem [resolvable:$true] %s235
          %241 = dma.hbm_to_vmem [thread:$0]  %s234, 128, %s236, %s224, 64, 64, 4
        $region36: #{tpu_custom_call.1} parent=31 // pred_fallthru
          _
      $region32: #{tpu_custom_call.1} parent=5 // pred_fallthru
        _
      %p242 = scmp.le.s32.totalorder 1, %s20
      %p243 = scmp.lt.s32.totalorder %s20, 9
      %p244 = pnand %p242, %p243
      %p245 = pneg %p244
      // Predicated region
      $region37: #{tpu_custom_call.1} parent=5 // pred_check
        _
      $region38: #{tpu_custom_call.1} parent=5 // pred_check_branch
        %247 = sbr.rel (%p244) target = $region40
      $region39: #{tpu_custom_call.1} parent=5 // pred_region
        %s248 = ssub.s32 %s20, 1
        %s249 = sand.u32 %s33, 1
        %s250 = scalar_lea.sflag [#allocation8], %s249
        %s251 = sand.u32 %s33, 1
        %s252 = smul.addr %s251, 8
        %s253 = scalar_lea.vmem [#allocation7], %s252
        // Predicated region
        $region41: #{tpu_custom_call.1} parent=39 // pred_check
          %p254 = pneg %p46
        $region42: #{tpu_custom_call.1} parent=39 // pred_check_branch
          %256 = sbr.rel (%p254) target = $region44
        $region43: #{tpu_custom_call.1} parent=39 // pred_region
          %258 = dma.done %s250, 128
        $region44: #{tpu_custom_call.1} parent=39 // pred_fallthru
          _
        // Predicated region
        $region45: #{tpu_custom_call.1} parent=39 // pred_check
          %p259 = pneg %p67
        $region46: #{tpu_custom_call.1} parent=39 // pred_check_branch
          %261 = sbr.rel (%p259) target = $region48
        $region47: #{tpu_custom_call.1} parent=39 // pred_region
          %263 = dma.done [#allocation11], 256
        $region48: #{tpu_custom_call.1} parent=39 // pred_fallthru
          _
        // Predicated region
        $region49: #{tpu_custom_call.1} parent=39 // pred_check
          %p264 = pneg %p88
        $region50: #{tpu_custom_call.1} parent=39 // pred_check_branch
          %266 = sbr.rel (%p264) target = $region52
        $region51: #{tpu_custom_call.1} parent=39 // pred_region
          %268 = dma.done [#allocation11], 18432
        $region52: #{tpu_custom_call.1} parent=39 // pred_fallthru
          _
        // Predicated region
        $region53: #{tpu_custom_call.1} parent=39 // pred_check
          %p269 = pneg %p109
        $region54: #{tpu_custom_call.1} parent=39 // pred_check_branch
          %271 = sbr.rel (%p269) target = $region56
        $region55: #{tpu_custom_call.1} parent=39 // pred_region
          %273 = dma.done [#allocation14], 3072
        $region56: #{tpu_custom_call.1} parent=39 // pred_fallthru
          _
        %s274 = sand.u32 %s33, 1
        %s275 = scalar_lea.sflag [#allocation8], %s274
        %s276 = sand.u32 %s33, 1
        %s277 = smul.addr %s276, 8
        %s278 = scalar_lea.vmem [#allocation7], %s277
        %p279 = pneg %p46
        %p280 = pneg %p43
        %p281 = pneg %p67
        %p282 = pneg %p64
        %p283 = pneg %p88
        %p284 = pneg %p85
        %p285 = pneg %p109
        %p286 = pneg %p106
        %p287 = pneg %p130
        %p288 = pneg %p127
        %p289 = pneg %p156
        %p290 = pneg %p153
        %s291 = sand.u32 %s143, 1
        %s292 = scalar_lea.sflag [#allocation9], %s291
        %s293 = sand.u32 %s143, 1
        %s294 = smul.addr %s293, 16
        %s295 = scalar_lea.vmem [#allocation15], %s294
        %p297 = scmp.eq.s32.totalorder %s25, 0
        // Predicated region
        $region57: #{tpu_custom_call.1} parent=39 // pred_check
          %p298 = pneg %p297
        $region58: #{tpu_custom_call.1} parent=39 // pred_check_branch
          %300 = sbr.rel (%p298) target = $region60
        $region59: #{tpu_custom_call.1} parent=39 // pred_region
          // Predicated region
          $region61: #{tpu_custom_call.1} parent=59 // pred_check
            _
          $region62: #{tpu_custom_call.1} parent=59 // pred_check_branch
            %302 = sbr.rel target = $region64
          $region63: #{tpu_custom_call.1} parent=59 // pred_region
            %303 = sst [smem:[#allocation18]] [#allocation17]
            %304 = sst [smem:[#allocation19]] [#allocation16]
          $region64: #{tpu_custom_call.1} parent=59 // pred_fallthru
            _
          %306 = shalt.err (0)
          %s308 = sshll.u32 %s0, 4
          %s309 = int_to_ptr.hbm [resolvable:$true] %s308
          %s310 = sshll.u32 [#allocation2], 4
          %s311 = int_to_ptr.vmem [resolvable:$true] %s310
          %313 = dma.hbm_to_vmem [thread:$0]  %s309, 128, %s311, [#allocation3]
          %s314 = smul.u32 4, 2
          %s315 = smul.u32 %s314, 1
          %s316 = sshll.u32 %s315, 4
          %317 = dma.done [#allocation3], %s316
          %v318 = vld [vmem:[#allocation10] sm:$0xff]
          %v319 = vld [vmem:[#allocation10 + $0x8] sm:$0xff]
          %320 = vst [vmem:[#allocation4] sm:$0xff] %v318
          %321 = vst [vmem:[#allocation4 + $0x8] sm:$0xff] %v319
        $region60: #{tpu_custom_call.1} parent=39 // pred_fallthru
          _
        %v322 = vld [vmem:[#allocation2] sm:$0xf]
        %v323 = vld [vmem:[#allocation2 + $0x4] sm:$0xf]
        %v324 = vld [vmem:[%s253] sm:$0xf]
        %v325 = vld [vmem:[%s253 + $0x4] sm:$0xf]
        %v326 = vld [vmem:[#allocation4] sm:$0xff]
        %v327 = vld [vmem:[#allocation4 + $0x8] sm:$0xff]
        %328 = vst [vmem:[#allocation5] sm:$0xf] %v324
        %329 = vst [vmem:[#allocation5 + $0x18] sm:$0xf] %v325
        %v330 = vpack.c.bf16 %v326, %v326
        %v331 = vpack.c.bf16 %v327, %v327
        %332 = vst [vmem:[#allocation5 + $0x4] sm:$0xf] %v330
        %333 = vst [vmem:[#allocation5 + $0x1c] sm:$0xf] %v331
        %v334 = vld [vmem:[#allocation5] sm:$0xff]
        %v335 = vld [vmem:[#allocation5 + $0x18] sm:$0xff]
        %v338 = vunpack.c.l.b16 %v322
        %v339 = vunpack.c.l.b16 %v323
        %v340 = vpack.c.b16 %v339, %v338
        %v343 = vunpack.c.l.b16 %v334
        %v344 = vunpack.c.h.b16 %v334
        %v345 = vunpack.c.l.b16 %v335
        %v346 = vunpack.c.h.b16 %v335
        %v347 = vpack.c.b16 %v345, %v343
        %v348 = vpack.c.b16 %v346, %v344
        %vm351 = vcmask 130048
        %v353 = vsel %vm351, %v340, 0
        %355 = vmatpush.bf16.msra.mxu0 0
        %356 = vmatpush.bf16.msra.mxu0 0
        %357 = vmatpush.bf16.msra.mxu0 0
        %358 = vmatpush.bf16.msra.mxu0 0
        %359 = vmatpush.bf16.msra.mxu0 0
        %360 = vmatpush.bf16.msra.mxu0 0
        %361 = vmatpush.bf16.msra.mxu0 0
        %362 = vmatpush.bf16.msra.mxu0 %v347
        %363 = vmatmul.bf16.gmra.mxu0 %v353
        %v364 = vpop.f32.mrf.mxu0
        %v365 = vadd.f32 0.0, %v364
        %v366 = vpop.f32.mrf.mxu0
        %v367 = vadd.f32 0.0, %v366
        %368 = vdwg.mxu0
        %369 = vmatpush.bf16.msra.mxu0 0
        %370 = vmatpush.bf16.msra.mxu0 0
        %371 = vmatpush.bf16.msra.mxu0 0
        %372 = vmatpush.bf16.msra.mxu0 0
        %373 = vmatpush.bf16.msra.mxu0 0
        %374 = vmatpush.bf16.msra.mxu0 0
        %375 = vmatpush.bf16.msra.mxu0 0
        %376 = vmatpush.bf16.msra.mxu0 %v348
        %377 = vmatmul.bf16.gmra.mxu0 %v353
        %v378 = vpop.f32.mrf.mxu0
        %v379 = vadd.f32 0.0, %v378
        %v380 = vpop.f32.mrf.mxu0
        %v381 = vadd.f32 0.0, %v380
        %382 = vdwg.mxu0
        %v383 = vmul.f32 %v365, 0.5
        %v384 = vmul.f32 %v379, 0.5
        %v385 = vmul.f32 %v367, 0.5
        %v386 = vmul.f32 %v381, 0.5
        %v387 = vpack.c.bf16 %v384, %v383
        %v388 = vpack.c.bf16 %v386, %v385
        %389 = vst [vmem:[#allocation5 + $0x8] sm:$0xff] %v387
        %390 = vst [vmem:[#allocation5 + $0x20] sm:$0xff] %v388
        %v393 = vunpack.c.l.b16 %v387
        %v394 = vunpack.c.h.b16 %v387
        %v395 = vunpack.c.l.b16 %v388
        %v396 = vunpack.c.h.b16 %v388
        %v397 = vpack.c.b16 %v395, %v393
        %v398 = vpack.c.b16 %v396, %v394
        %401 = vmatpush.bf16.msra.mxu0 0
        %402 = vmatpush.bf16.msra.mxu0 0
        %403 = vmatpush.bf16.msra.mxu0 0
        %404 = vmatpush.bf16.msra.mxu0 0
        %405 = vmatpush.bf16.msra.mxu0 0
        %406 = vmatpush.bf16.msra.mxu0 0
        %407 = vmatpush.bf16.msra.mxu0 0
        %408 = vmatpush.bf16.msra.mxu0 %v397
        %409 = vmatmul.bf16.gmra.mxu0 %v353
        %v410 = vpop.f32.mrf.mxu0
        %v411 = vadd.f32 0.0, %v410
        %v412 = vpop.f32.mrf.mxu0
        %v413 = vadd.f32 0.0, %v412
        %414 = vdwg.mxu0
        %415 = vmatpush.bf16.msra.mxu0 0
        %416 = vmatpush.bf16.msra.mxu0 0
        %417 = vmatpush.bf16.msra.mxu0 0
        %418 = vmatpush.bf16.msra.mxu0 0
        %419 = vmatpush.bf16.msra.mxu0 0
        %420 = vmatpush.bf16.msra.mxu0 0
        %421 = vmatpush.bf16.msra.mxu0 0
        %422 = vmatpush.bf16.msra.mxu0 %v398
        %423 = vmatmul.bf16.gmra.mxu0 %v353
        %v424 = vpop.f32.mrf.mxu0
        %v425 = vadd.f32 0.0, %v424
        %v426 = vpop.f32.mrf.mxu0
        %v427 = vadd.f32 0.0, %v426
        %428 = vdwg.mxu0
        %v429 = vunpack.c.l.bf16 %v334
        %v430 = vunpack.c.h.bf16 %v334
        %v431 = vunpack.c.l.bf16 %v335
        %v432 = vunpack.c.h.bf16 %v335
        %v433 = vsub.f32 %v411, %v429
        %v434 = vsub.f32 %v425, %v430
        %v435 = vsub.f32 %v413, %v431
        %v436 = vsub.f32 %v427, %v432
        %v437 = vpack.c.bf16 %v434, %v433
        %v438 = vpack.c.bf16 %v436, %v435
        %439 = vst [vmem:[#allocation5 + $0x10] sm:$0xff] %v437
        %440 = vst [vmem:[#allocation5 + $0x28] sm:$0xff] %v438
        %v441 = vld [vmem:[#allocation5] sm:$0xff]
        %v442 = vld [vmem:[#allocation5 + $0x8] sm:$0xff]
        %v443 = vld [vmem:[#allocation5 + $0x10] sm:$0xff]
        %v444 = vld [vmem:[#allocation5 + $0x18] sm:$0xff]
        %v445 = vld [vmem:[#allocation5 + $0x20] sm:$0xff]
        %v446 = vld [vmem:[#allocation5 + $0x28] sm:$0xff]
        %v447 = vld [vmem:[#allocation12] sm:$0xff]
        %v448 = vld [vmem:[#allocation12 + $0x8] sm:$0xf]
        %v449 = vld [vmem:[#allocation12 + $0xc] sm:$0xff]
        %v450 = vld [vmem:[#allocation12 + $0x14] sm:$0xf]
        %v451 = vld [vmem:[#allocation12 + $0x18] sm:$0xff]
        %v452 = vld [vmem:[#allocation12 + $0x20] sm:$0xf]
        %v453 = vld [vmem:[#allocation12 + $0x24] sm:$0xff]
        %v454 = vld [vmem:[#allocation12 + $0x2c] sm:$0xf]
        %v455 = vld [vmem:[#allocation12 + $0x30] sm:$0xff]
        %v456 = vld [vmem:[#allocation12 + $0x38] sm:$0xf]
        %v457 = vld [vmem:[#allocation12 + $0x3c] sm:$0xff]
        %v458 = vld [vmem:[#allocation12 + $0x44] sm:$0xf]
        %v459 = vld [vmem:[#allocation12 + $0x48] sm:$0xff]
        %v460 = vld [vmem:[#allocation12 + $0x50] sm:$0xf]
        %v461 = vld [vmem:[#allocation12 + $0x54] sm:$0xff]
        %v462 = vld [vmem:[#allocation12 + $0x5c] sm:$0xf]
        %v463 = vld [vmem:[#allocation12 + $0x60] sm:$0xff]
        %v464 = vld [vmem:[#allocation12 + $0x68] sm:$0xf]
        %v465 = vld [vmem:[#allocation12 + $0x6c] sm:$0xff]
        %v466 = vld [vmem:[#allocation12 + $0x74] sm:$0xf]
        %v467 = vld [vmem:[#allocation12 + $0x78] sm:$0xff]
        %v468 = vld [vmem:[#allocation12 + $0x80] sm:$0xf]
        %v469 = vld [vmem:[#allocation12 + $0x84] sm:$0xff]
        %v470 = vld [vmem:[#allocation12 + $0x8c] sm:$0xf]
        %v471 = vld [vmem:[#allocation12 + $0x90] sm:$0xff]
        %v472 = vld [vmem:[#allocation12 + $0x98] sm:$0xf]
        %v473 = vld [vmem:[#allocation12 + $0x9c] sm:$0xff]
        %v474 = vld [vmem:[#allocation12 + $0xa4] sm:$0xf]
        %v475 = vld [vmem:[#allocation12 + $0xa8] sm:$0xff]
        %v476 = vld [vmem:[#allocation12 + $0xb0] sm:$0xf]
        %v477 = vld [vmem:[#allocation12 + $0xb4] sm:$0xff]
        %v478 = vld [vmem:[#allocation12 + $0xbc] sm:$0xf]
        %v479 = vld [vmem:[#allocation12 + $0xc0] sm:$0xff]
        %v480 = vld [vmem:[#allocation12 + $0xc8] sm:$0xf]
        %v481 = vld [vmem:[#allocation12 + $0xcc] sm:$0xff]
        %v482 = vld [vmem:[#allocation12 + $0xd4] sm:$0xf]
        %v483 = vld [vmem:[#allocation12 + $0xd8] sm:$0xff]
        %v484 = vld [vmem:[#allocation12 + $0xe0] sm:$0xf]
        %v485 = vld [vmem:[#allocation12 + $0xe4] sm:$0xff]
        %v486 = vld [vmem:[#allocation12 + $0xec] sm:$0xf]
        %v487 = vld [vmem:[#allocation12 + $0xf0] sm:$0xff]
        %v488 = vld [vmem:[#allocation12 + $0xf8] sm:$0xf]
        %v489 = vld [vmem:[#allocation12 + $0xfc] sm:$0xff]
        %v490 = vld [vmem:[#allocation12 + $0x104] sm:$0xf]
        %v491 = vld [vmem:[#allocation12 + $0x108] sm:$0xff]
        %v492 = vld [vmem:[#allocation12 + $0x110] sm:$0xf]
        %v493 = vld [vmem:[#allocation12 + $0x114] sm:$0xff]
        %v494 = vld [vmem:[#allocation12 + $0x11c] sm:$0xf]
        %v495 = vld [vmem:[#allocation12 + $0x120] sm:$0xff]
        %v496 = vld [vmem:[#allocation12 + $0x128] sm:$0xf]
        %v497 = vld [vmem:[#allocation12 + $0x12c] sm:$0xff]
        %v498 = vld [vmem:[#allocation12 + $0x134] sm:$0xf]
        %v499 = vld [vmem:[#allocation12 + $0x138] sm:$0xff]
        %v500 = vld [vmem:[#allocation12 + $0x140] sm:$0xf]
        %v501 = vld [vmem:[#allocation12 + $0x144] sm:$0xff]
        %v502 = vld [vmem:[#allocation12 + $0x14c] sm:$0xf]
        %v503 = vld [vmem:[#allocation12 + $0x150] sm:$0xff]
        %v504 = vld [vmem:[#allocation12 + $0x158] sm:$0xf]
        %v505 = vld [vmem:[#allocation12 + $0x15c] sm:$0xff]
        %v506 = vld [vmem:[#allocation12 + $0x164] sm:$0xf]
        %v507 = vld [vmem:[#allocation12 + $0x168] sm:$0xff]
        %v508 = vld [vmem:[#allocation12 + $0x170] sm:$0xf]
        %v509 = vld [vmem:[#allocation12 + $0x174] sm:$0xff]
        %v510 = vld [vmem:[#allocation12 + $0x17c] sm:$0xf]
        %v511 = vld [vmem:[#allocation12 + $0x180] sm:$0xff]
        %v512 = vld [vmem:[#allocation12 + $0x188] sm:$0xf]
        %v513 = vld [vmem:[#allocation12 + $0x18c] sm:$0xff]
        %v514 = vld [vmem:[#allocation12 + $0x194] sm:$0xf]
        %v515 = vld [vmem:[#allocation12 + $0x198] sm:$0xff]
        %v516 = vld [vmem:[#allocation12 + $0x1a0] sm:$0xf]
        %v517 = vld [vmem:[#allocation12 + $0x1a4] sm:$0xff]
        %v518 = vld [vmem:[#allocation12 + $0x1ac] sm:$0xf]
        %v519 = vld [vmem:[#allocation12 + $0x1b0] sm:$0xff]
        %v520 = vld [vmem:[#allocation12 + $0x1b8] sm:$0xf]
        %v521 = vld [vmem:[#allocation12 + $0x1bc] sm:$0xff]
        %v522 = vld [vmem:[#allocation12 + $0x1c4] sm:$0xf]
        %v523 = vld [vmem:[#allocation12 + $0x1c8] sm:$0xff]
        %v524 = vld [vmem:[#allocation12 + $0x1d0] sm:$0xf]
        %v525 = vld [vmem:[#allocation12 + $0x1d4] sm:$0xff]
        %v526 = vld [vmem:[#allocation12 + $0x1dc] sm:$0xf]
        %v527 = vld [vmem:[#allocation12 + $0x1e0] sm:$0xff]
        %v528 = vld [vmem:[#allocation12 + $0x1e8] sm:$0xf]
        %v529 = vld [vmem:[#allocation12 + $0x1ec] sm:$0xff]
        %v530 = vld [vmem:[#allocation12 + $0x1f4] sm:$0xf]
        %v531 = vld [vmem:[#allocation12 + $0x1f8] sm:$0xff]
        %v532 = vld [vmem:[#allocation12 + $0x200] sm:$0xf]
        %v533 = vld [vmem:[#allocation12 + $0x204] sm:$0xff]
        %v534 = vld [vmem:[#allocation12 + $0x20c] sm:$0xf]
        %v535 = vld [vmem:[#allocation12 + $0x210] sm:$0xff]
        %v536 = vld [vmem:[#allocation12 + $0x218] sm:$0xf]
        %v537 = vld [vmem:[#allocation12 + $0x21c] sm:$0xff]
        %v538 = vld [vmem:[#allocation12 + $0x224] sm:$0xf]
        %v539 = vld [vmem:[#allocation12 + $0x228] sm:$0xff]
        %v540 = vld [vmem:[#allocation12 + $0x230] sm:$0xf]
        %v541 = vld [vmem:[#allocation12 + $0x234] sm:$0xff]
        %v542 = vld [vmem:[#allocation12 + $0x23c] sm:$0xf]
        %v543 = vld [vmem:[#allocation12 + $0x240] sm:$0xff]
        %v544 = vld [vmem:[#allocation12 + $0x248] sm:$0xf]
        %v545 = vld [vmem:[#allocation12 + $0x24c] sm:$0xff]
        %v546 = vld [vmem:[#allocation12 + $0x254] sm:$0xf]
        %v547 = vld [vmem:[#allocation12 + $0x258] sm:$0xff]
        %v548 = vld [vmem:[#allocation12 + $0x260] sm:$0xf]
        %v549 = vld [vmem:[#allocation12 + $0x264] sm:$0xff]
        %v550 = vld [vmem:[#allocation12 + $0x26c] sm:$0xf]
        %v551 = vld [vmem:[#allocation12 + $0x270] sm:$0xff]
        %v552 = vld [vmem:[#allocation12 + $0x278] sm:$0xf]
        %v553 = vld [vmem:[#allocation12 + $0x27c] sm:$0xff]
        %v554 = vld [vmem:[#allocation12 + $0x284] sm:$0xf]
        %v555 = vld [vmem:[#allocation12 + $0x288] sm:$0xff]
        %v556 = vld [vmem:[#allocation12 + $0x290] sm:$0xf]
        %v557 = vld [vmem:[#allocation12 + $0x294] sm:$0xff]
        %v558 = vld [vmem:[#allocation12 + $0x29c] sm:$0xf]
        %v559 = vld [vmem:[#allocation12 + $0x2a0] sm:$0xff]
        %v560 = vld [vmem:[#allocation12 + $0x2a8] sm:$0xf]
        %v561 = vld [vmem:[#allocation12 + $0x2ac] sm:$0xff]
        %v562 = vld [vmem:[#allocation12 + $0x2b4] sm:$0xf]
        %v563 = vld [vmem:[#allocation12 + $0x2b8] sm:$0xff]
        %v564 = vld [vmem:[#allocation12 + $0x2c0] sm:$0xf]
        %v565 = vld [vmem:[#allocation12 + $0x2c4] sm:$0xff]
        %v566 = vld [vmem:[#allocation12 + $0x2cc] sm:$0xf]
        %v567 = vld [vmem:[#allocation12 + $0x2d0] sm:$0xff]
        %v568 = vld [vmem:[#allocation12 + $0x2d8] sm:$0xf]
        %v569 = vld [vmem:[#allocation12 + $0x2dc] sm:$0xff]
        %v570 = vld [vmem:[#allocation12 + $0x2e4] sm:$0xf]
        %v571 = vld [vmem:[#allocation12 + $0x2e8] sm:$0xff]
        %v572 = vld [vmem:[#allocation12 + $0x2f0] sm:$0xf]
        %v573 = vld [vmem:[#allocation12 + $0x2f4] sm:$0xff]
        %v574 = vld [vmem:[#allocation12 + $0x2fc] sm:$0xf]
        %v575 = vld [vmem:[#allocation12 + $0x300] sm:$0xff]
        %v576 = vld [vmem:[#allocation12 + $0x308] sm:$0xf]
        %v577 = vld [vmem:[#allocation12 + $0x30c] sm:$0xff]
        %v578 = vld [vmem:[#allocation12 + $0x314] sm:$0xf]
        %v579 = vld [vmem:[#allocation12 + $0x318] sm:$0xff]
        %v580 = vld [vmem:[#allocation12 + $0x320] sm:$0xf]
        %v581 = vld [vmem:[#allocation12 + $0x324] sm:$0xff]
        %v582 = vld [vmem:[#allocation12 + $0x32c] sm:$0xf]
        %v583 = vld [vmem:[#allocation12 + $0x330] sm:$0xff]
        %v584 = vld [vmem:[#allocation12 + $0x338] sm:$0xf]
        %v585 = vld [vmem:[#allocation12 + $0x33c] sm:$0xff]
        %v586 = vld [vmem:[#allocation12 + $0x344] sm:$0xf]
        %v587 = vld [vmem:[#allocation12 + $0x348] sm:$0xff]
        %v588 = vld [vmem:[#allocation12 + $0x350] sm:$0xf]
        %v589 = vld [vmem:[#allocation12 + $0x354] sm:$0xff]
        %v590 = vld [vmem:[#allocation12 + $0x35c] sm:$0xf]
        %v591 = vld [vmem:[#allocation12 + $0x360] sm:$0xff]
        %v592 = vld [vmem:[#allocation12 + $0x368] sm:$0xf]
        %v593 = vld [vmem:[#allocation12 + $0x36c] sm:$0xff]
        %v594 = vld [vmem:[#allocation12 + $0x374] sm:$0xf]
        %v595 = vld [vmem:[#allocation12 + $0x378] sm:$0xff]
        %v596 = vld [vmem:[#allocation12 + $0x380] sm:$0xf]
        %v597 = vld [vmem:[#allocation12 + $0x384] sm:$0xff]
        %v598 = vld [vmem:[#allocation12 + $0x38c] sm:$0xf]
        %v599 = vld [vmem:[#allocation12 + $0x390] sm:$0xff]
        %v600 = vld [vmem:[#allocation12 + $0x398] sm:$0xf]
        %v601 = vld [vmem:[#allocation12 + $0x39c] sm:$0xff]
        %v602 = vld [vmem:[#allocation12 + $0x3a4] sm:$0xf]
        %v603 = vld [vmem:[#allocation12 + $0x3a8] sm:$0xff]
        %v604 = vld [vmem:[#allocation12 + $0x3b0] sm:$0xf]
        %v605 = vld [vmem:[#allocation12 + $0x3b4] sm:$0xff]
        %v606 = vld [vmem:[#allocation12 + $0x3bc] sm:$0xf]
        %v607 = vld [vmem:[#allocation12 + $0x3c0] sm:$0xff]
        %v608 = vld [vmem:[#allocation12 + $0x3c8] sm:$0xf]
        %v609 = vld [vmem:[#allocation12 + $0x3cc] sm:$0xff]
        %v610 = vld [vmem:[#allocation12 + $0x3d4] sm:$0xf]
        %v611 = vld [vmem:[#allocation12 + $0x3d8] sm:$0xff]
        %v612 = vld [vmem:[#allocation12 + $0x3e0] sm:$0xf]
        %v613 = vld [vmem:[#allocation12 + $0x3e4] sm:$0xff]
        %v614 = vld [vmem:[#allocation12 + $0x3ec] sm:$0xf]
        %v615 = vld [vmem:[#allocation12 + $0x3f0] sm:$0xff]
        %v616 = vld [vmem:[#allocation12 + $0x3f8] sm:$0xf]
        %v617 = vld [vmem:[#allocation12 + $0x3fc] sm:$0xff]
        %v618 = vld [vmem:[#allocation12 + $0x404] sm:$0xf]
        %v619 = vld [vmem:[#allocation12 + $0x408] sm:$0xff]
        %v620 = vld [vmem:[#allocation12 + $0x410] sm:$0xf]
        %v621 = vld [vmem:[#allocation12 + $0x414] sm:$0xff]
        %v622 = vld [vmem:[#allocation12 + $0x41c] sm:$0xf]
        %v623 = vld [vmem:[#allocation12 + $0x420] sm:$0xff]
        %v624 = vld [vmem:[#allocation12 + $0x428] sm:$0xf]
        %v625 = vld [vmem:[#allocation12 + $0x42c] sm:$0xff]
        %v626 = vld [vmem:[#allocation12 + $0x434] sm:$0xf]
        %v627 = vld [vmem:[#allocation12 + $0x438] sm:$0xff]
        %v628 = vld [vmem:[#allocation12 + $0x440] sm:$0xf]
        %v629 = vld [vmem:[#allocation12 + $0x444] sm:$0xff]
        %v630 = vld [vmem:[#allocation12 + $0x44c] sm:$0xf]
        %v631 = vld [vmem:[#allocation12 + $0x450] sm:$0xff]
        %v632 = vld [vmem:[#allocation12 + $0x458] sm:$0xf]
        %v633 = vld [vmem:[#allocation12 + $0x45c] sm:$0xff]
        %v634 = vld [vmem:[#allocation12 + $0x464] sm:$0xf]
        %v635 = vld [vmem:[#allocation12 + $0x468] sm:$0xff]
        %v636 = vld [vmem:[#allocation12 + $0x470] sm:$0xf]
        %v637 = vld [vmem:[#allocation12 + $0x474] sm:$0xff]
        %v638 = vld [vmem:[#allocation12 + $0x47c] sm:$0xf]
        %v639 = vld [vmem:[%s5] sm:$0x7]
        %v641 = vperm.slane %v639, 0
        %v642 = vperm.slane %v639, 1
        %v643 = vperm.slane %v639, 2
        %v653 = vunpack.c.l.b16 %v441
        %v654 = vunpack.c.h.b16 %v441
        %v655 = vunpack.c.l.b16 %v442
        %v656 = vunpack.c.h.b16 %v442
        %v657 = vunpack.c.l.b16 %v443
        %v658 = vunpack.c.h.b16 %v443
        %v659 = vunpack.c.l.b16 %v444
        %v660 = vunpack.c.h.b16 %v444
        %v661 = vunpack.c.l.b16 %v445
        %v662 = vunpack.c.h.b16 %v445
        %v663 = vunpack.c.l.b16 %v446
        %v664 = vunpack.c.h.b16 %v446
        %v665 = vpack.c.b16 %v659, %v653
        %v666 = vpack.c.b16 %v660, %v654
        %v667 = vpack.c.b16 %v661, %v655
        %v668 = vpack.c.b16 %v662, %v656
        %v669 = vpack.c.b16 %v663, %v657
        %v670 = vpack.c.b16 %v664, %v658
        %v869 = vunpack.c.l.b16 %v447
        %v870 = vunpack.c.h.b16 %v447
        %v871 = vunpack.c.l.b16 %v448
        %v872 = vunpack.c.l.b16 %v449
        %v873 = vunpack.c.h.b16 %v449
        %v874 = vunpack.c.l.b16 %v450
        %v875 = vunpack.c.l.b16 %v451
        %v876 = vunpack.c.h.b16 %v451
        %v877 = vunpack.c.l.b16 %v452
        %v878 = vunpack.c.l.b16 %v453
        %v879 = vunpack.c.h.b16 %v453
        %v880 = vunpack.c.l.b16 %v454
        %v881 = vunpack.c.l.b16 %v455
        %v882 = vunpack.c.h.b16 %v455
        %v883 = vunpack.c.l.b16 %v456
        %v884 = vunpack.c.l.b16 %v457
        %v885 = vunpack.c.h.b16 %v457
        %v886 = vunpack.c.l.b16 %v458
        %v887 = vunpack.c.l.b16 %v459
        %v888 = vunpack.c.h.b16 %v459
        %v889 = vunpack.c.l.b16 %v460
        %v890 = vunpack.c.l.b16 %v461
        %v891 = vunpack.c.h.b16 %v461
        %v892 = vunpack.c.l.b16 %v462
        %v893 = vunpack.c.l.b16 %v463
        %v894 = vunpack.c.h.b16 %v463
        %v895 = vunpack.c.l.b16 %v464
        %v896 = vunpack.c.l.b16 %v465
        %v897 = vunpack.c.h.b16 %v465
        %v898 = vunpack.c.l.b16 %v466
        %v899 = vunpack.c.l.b16 %v467
        %v900 = vunpack.c.h.b16 %v467
        %v901 = vunpack.c.l.b16 %v468
        %v902 = vunpack.c.l.b16 %v469
        %v903 = vunpack.c.h.b16 %v469
        %v904 = vunpack.c.l.b16 %v470
        %v905 = vunpack.c.l.b16 %v471
        %v906 = vunpack.c.h.b16 %v471
        %v907 = vunpack.c.l.b16 %v472
        %v908 = vunpack.c.l.b16 %v473
        %v909 = vunpack.c.h.b16 %v473
        %v910 = vunpack.c.l.b16 %v474
        %v911 = vunpack.c.l.b16 %v475
        %v912 = vunpack.c.h.b16 %v475
        %v913 = vunpack.c.l.b16 %v476
        %v914 = vunpack.c.l.b16 %v477
        %v915 = vunpack.c.h.b16 %v477
        %v916 = vunpack.c.l.b16 %v478
        %v917 = vunpack.c.l.b16 %v479
        %v918 = vunpack.c.h.b16 %v479
        %v919 = vunpack.c.l.b16 %v480
        %v920 = vunpack.c.l.b16 %v481
        %v921 = vunpack.c.h.b16 %v481
        %v922 = vunpack.c.l.b16 %v482
        %v923 = vunpack.c.l.b16 %v483
        %v924 = vunpack.c.h.b16 %v483
        %v925 = vunpack.c.l.b16 %v484
        %v926 = vunpack.c.l.b16 %v485
        %v927 = vunpack.c.h.b16 %v485
        %v928 = vunpack.c.l.b16 %v486
        %v929 = vunpack.c.l.b16 %v487
        %v930 = vunpack.c.h.b16 %v487
        %v931 = vunpack.c.l.b16 %v488
        %v932 = vunpack.c.l.b16 %v489
        %v933 = vunpack.c.h.b16 %v489
        %v934 = vunpack.c.l.b16 %v490
        %v935 = vunpack.c.l.b16 %v491
        %v936 = vunpack.c.h.b16 %v491
        %v937 = vunpack.c.l.b16 %v492
        %v938 = vunpack.c.l.b16 %v493
        %v939 = vunpack.c.h.b16 %v493
        %v940 = vunpack.c.l.b16 %v494
        %v941 = vunpack.c.l.b16 %v495
        %v942 = vunpack.c.h.b16 %v495
        %v943 = vunpack.c.l.b16 %v496
        %v944 = vunpack.c.l.b16 %v497
        %v945 = vunpack.c.h.b16 %v497
        %v946 = vunpack.c.l.b16 %v498
        %v947 = vunpack.c.l.b16 %v499
        %v948 = vunpack.c.h.b16 %v499
        %v949 = vunpack.c.l.b16 %v500
        %v950 = vunpack.c.l.b16 %v501
        %v951 = vunpack.c.h.b16 %v501
        %v952 = vunpack.c.l.b16 %v502
        %v953 = vunpack.c.l.b16 %v503
        %v954 = vunpack.c.h.b16 %v503
        %v955 = vunpack.c.l.b16 %v504
        %v956 = vunpack.c.l.b16 %v505
        %v957 = vunpack.c.h.b16 %v505
        %v958 = vunpack.c.l.b16 %v506
        %v959 = vunpack.c.l.b16 %v507
        %v960 = vunpack.c.h.b16 %v507
        %v961 = vunpack.c.l.b16 %v508
        %v962 = vunpack.c.l.b16 %v509
        %v963 = vunpack.c.h.b16 %v509
        %v964 = vunpack.c.l.b16 %v510
        %v965 = vunpack.c.l.b16 %v511
        %v966 = vunpack.c.h.b16 %v511
        %v967 = vunpack.c.l.b16 %v512
        %v968 = vunpack.c.l.b16 %v513
        %v969 = vunpack.c.h.b16 %v513
        %v970 = vunpack.c.l.b16 %v514
        %v971 = vunpack.c.l.b16 %v515
        %v972 = vunpack.c.h.b16 %v515
        %v973 = vunpack.c.l.b16 %v516
        %v974 = vunpack.c.l.b16 %v517
        %v975 = vunpack.c.h.b16 %v517
        %v976 = vunpack.c.l.b16 %v518
        %v977 = vunpack.c.l.b16 %v519
        %v978 = vunpack.c.h.b16 %v519
        %v979 = vunpack.c.l.b16 %v520
        %v980 = vunpack.c.l.b16 %v521
        %v981 = vunpack.c.h.b16 %v521
        %v982 = vunpack.c.l.b16 %v522
        %v983 = vunpack.c.l.b16 %v523
        %v984 = vunpack.c.h.b16 %v523
        %v985 = vunpack.c.l.b16 %v524
        %v986 = vunpack.c.l.b16 %v525
        %v987 = vunpack.c.h.b16 %v525
        %v988 = vunpack.c.l.b16 %v526
        %v989 = vunpack.c.l.b16 %v527
        %v990 = vunpack.c.h.b16 %v527
        %v991 = vunpack.c.l.b16 %v528
        %v992 = vunpack.c.l.b16 %v529
        %v993 = vunpack.c.h.b16 %v529
        %v994 = vunpack.c.l.b16 %v530
        %v995 = vunpack.c.l.b16 %v531
        %v996 = vunpack.c.h.b16 %v531
        %v997 = vunpack.c.l.b16 %v532
        %v998 = vunpack.c.l.b16 %v533
        %v999 = vunpack.c.h.b16 %v533
        %v1000 = vunpack.c.l.b16 %v534
        %v1001 = vunpack.c.l.b16 %v535
        %v1002 = vunpack.c.h.b16 %v535
        %v1003 = vunpack.c.l.b16 %v536
        %v1004 = vunpack.c.l.b16 %v537
        %v1005 = vunpack.c.h.b16 %v537
        %v1006 = vunpack.c.l.b16 %v538
        %v1007 = vunpack.c.l.b16 %v539
        %v1008 = vunpack.c.h.b16 %v539
        %v1009 = vunpack.c.l.b16 %v540
        %v1010 = vunpack.c.l.b16 %v541
        %v1011 = vunpack.c.h.b16 %v541
        %v1012 = vunpack.c.l.b16 %v542
        %v1013 = vunpack.c.l.b16 %v543
        %v1014 = vunpack.c.h.b16 %v543
        %v1015 = vunpack.c.l.b16 %v544
        %v1016 = vunpack.c.l.b16 %v545
        %v1017 = vunpack.c.h.b16 %v545
        %v1018 = vunpack.c.l.b16 %v546
        %v1019 = vunpack.c.l.b16 %v547
        %v1020 = vunpack.c.h.b16 %v547
        %v1021 = vunpack.c.l.b16 %v548
        %v1022 = vunpack.c.l.b16 %v549
        %v1023 = vunpack.c.h.b16 %v549
        %v1024 = vunpack.c.l.b16 %v550
        %v1025 = vunpack.c.l.b16 %v551
        %v1026 = vunpack.c.h.b16 %v551
        %v1027 = vunpack.c.l.b16 %v552
        %v1028 = vunpack.c.l.b16 %v553
        %v1029 = vunpack.c.h.b16 %v553
        %v1030 = vunpack.c.l.b16 %v554
        %v1031 = vunpack.c.l.b16 %v555
        %v1032 = vunpack.c.h.b16 %v555
        %v1033 = vunpack.c.l.b16 %v556
        %v1034 = vunpack.c.l.b16 %v557
        %v1035 = vunpack.c.h.b16 %v557
        %v1036 = vunpack.c.l.b16 %v558
        %v1037 = vunpack.c.l.b16 %v559
        %v1038 = vunpack.c.h.b16 %v559
        %v1039 = vunpack.c.l.b16 %v560
        %v1040 = vunpack.c.l.b16 %v561
        %v1041 = vunpack.c.h.b16 %v561
        %v1042 = vunpack.c.l.b16 %v562
        %v1043 = vunpack.c.l.b16 %v563
        %v1044 = vunpack.c.h.b16 %v563
        %v1045 = vunpack.c.l.b16 %v564
        %v1046 = vunpack.c.l.b16 %v565
        %v1047 = vunpack.c.h.b16 %v565
        %v1048 = vunpack.c.l.b16 %v566
        %v1049 = vunpack.c.l.b16 %v567
        %v1050 = vunpack.c.h.b16 %v567
        %v1051 = vunpack.c.l.b16 %v568
        %v1052 = vunpack.c.l.b16 %v569
        %v1053 = vunpack.c.h.b16 %v569
        %v1054 = vunpack.c.l.b16 %v570
        %v1055 = vunpack.c.l.b16 %v571
        %v1056 = vunpack.c.h.b16 %v571
        %v1057 = vunpack.c.l.b16 %v572
        %v1058 = vunpack.c.l.b16 %v573
        %v1059 = vunpack.c.h.b16 %v573
        %v1060 = vunpack.c.l.b16 %v574
        %v1061 = vunpack.c.l.b16 %v575
        %v1062 = vunpack.c.h.b16 %v575
        %v1063 = vunpack.c.l.b16 %v576
        %v1064 = vunpack.c.l.b16 %v577
        %v1065 = vunpack.c.h.b16 %v577
        %v1066 = vunpack.c.l.b16 %v578
        %v1067 = vunpack.c.l.b16 %v579
        %v1068 = vunpack.c.h.b16 %v579
        %v1069 = vunpack.c.l.b16 %v580
        %v1070 = vunpack.c.l.b16 %v581
        %v1071 = vunpack.c.h.b16 %v581
        %v1072 = vunpack.c.l.b16 %v582
        %v1073 = vunpack.c.l.b16 %v583
        %v1074 = vunpack.c.h.b16 %v583
        %v1075 = vunpack.c.l.b16 %v584
        %v1076 = vunpack.c.l.b16 %v585
        %v1077 = vunpack.c.h.b16 %v585
        %v1078 = vunpack.c.l.b16 %v586
        %v1079 = vunpack.c.l.b16 %v587
        %v1080 = vunpack.c.h.b16 %v587
        %v1081 = vunpack.c.l.b16 %v588
        %v1082 = vunpack.c.l.b16 %v589
        %v1083 = vunpack.c.h.b16 %v589
        %v1084 = vunpack.c.l.b16 %v590
        %v1085 = vunpack.c.l.b16 %v591
        %v1086 = vunpack.c.h.b16 %v591
        %v1087 = vunpack.c.l.b16 %v592
        %v1088 = vunpack.c.l.b16 %v593
        %v1089 = vunpack.c.h.b16 %v593
        %v1090 = vunpack.c.l.b16 %v594
        %v1091 = vunpack.c.l.b16 %v595
        %v1092 = vunpack.c.h.b16 %v595
        %v1093 = vunpack.c.l.b16 %v596
        %v1094 = vunpack.c.l.b16 %v597
        %v1095 = vunpack.c.h.b16 %v597
        %v1096 = vunpack.c.l.b16 %v598
        %v1097 = vunpack.c.l.b16 %v599
        %v1098 = vunpack.c.h.b16 %v599
        %v1099 = vunpack.c.l.b16 %v600
        %v1100 = vunpack.c.l.b16 %v601
        %v1101 = vunpack.c.h.b16 %v601
        %v1102 = vunpack.c.l.b16 %v602
        %v1103 = vunpack.c.l.b16 %v603
        %v1104 = vunpack.c.h.b16 %v603
        %v1105 = vunpack.c.l.b16 %v604
        %v1106 = vunpack.c.l.b16 %v605
        %v1107 = vunpack.c.h.b16 %v605
        %v1108 = vunpack.c.l.b16 %v606
        %v1109 = vunpack.c.l.b16 %v607
        %v1110 = vunpack.c.h.b16 %v607
        %v1111 = vunpack.c.l.b16 %v608
        %v1112 = vunpack.c.l.b16 %v609
        %v1113 = vunpack.c.h.b16 %v609
        %v1114 = vunpack.c.l.b16 %v610
        %v1115 = vunpack.c.l.b16 %v611
        %v1116 = vunpack.c.h.b16 %v611
        %v1117 = vunpack.c.l.b16 %v612
        %v1118 = vunpack.c.l.b16 %v613
        %v1119 = vunpack.c.h.b16 %v613
        %v1120 = vunpack.c.l.b16 %v614
        %v1121 = vunpack.c.l.b16 %v615
        %v1122 = vunpack.c.h.b16 %v615
        %v1123 = vunpack.c.l.b16 %v616
        %v1124 = vunpack.c.l.b16 %v617
        %v1125 = vunpack.c.h.b16 %v617
        %v1126 = vunpack.c.l.b16 %v618
        %v1127 = vunpack.c.l.b16 %v619
        %v1128 = vunpack.c.h.b16 %v619
        %v1129 = vunpack.c.l.b16 %v620
        %v1130 = vunpack.c.l.b16 %v621
        %v1131 = vunpack.c.h.b16 %v621
        %v1132 = vunpack.c.l.b16 %v622
        %v1133 = vunpack.c.l.b16 %v623
        %v1134 = vunpack.c.h.b16 %v623
        %v1135 = vunpack.c.l.b16 %v624
        %v1136 = vunpack.c.l.b16 %v625
        %v1137 = vunpack.c.h.b16 %v625
        %v1138 = vunpack.c.l.b16 %v626
        %v1139 = vunpack.c.l.b16 %v627
        %v1140 = vunpack.c.h.b16 %v627
        %v1141 = vunpack.c.l.b16 %v628
        %v1142 = vunpack.c.l.b16 %v629
        %v1143 = vunpack.c.h.b16 %v629
        %v1144 = vunpack.c.l.b16 %v630
        %v1145 = vunpack.c.l.b16 %v631
        %v1146 = vunpack.c.h.b16 %v631
        %v1147 = vunpack.c.l.b16 %v632
        %v1148 = vunpack.c.l.b16 %v633
        %v1149 = vunpack.c.h.b16 %v633
        %v1150 = vunpack.c.l.b16 %v634
        %v1151 = vunpack.c.l.b16 %v635
        %v1152 = vunpack.c.h.b16 %v635
        %v1153 = vunpack.c.l.b16 %v636
        %v1154 = vunpack.c.l.b16 %v637
        %v1155 = vunpack.c.h.b16 %v637
        %v1156 = vunpack.c.l.b16 %v638
        %v1157 = vpack.c.b16 %v872, %v869
        %v1158 = vpack.c.b16 %v873, %v870
        %v1159 = vpack.c.b16 %v874, %v871
        %v1160 = vpack.c.b16 %v878, %v875
        %v1161 = vpack.c.b16 %v879, %v876
        %v1162 = vpack.c.b16 %v880, %v877
        %v1163 = vpack.c.b16 %v884, %v881
        %v1164 = vpack.c.b16 %v885, %v882
        %v1165 = vpack.c.b16 %v886, %v883
        %v1166 = vpack.c.b16 %v890, %v887
        %v1167 = vpack.c.b16 %v891, %v888
        %v1168 = vpack.c.b16 %v892, %v889
        %v1169 = vpack.c.b16 %v896, %v893
        %v1170 = vpack.c.b16 %v897, %v894
        %v1171 = vpack.c.b16 %v898, %v895
        %v1172 = vpack.c.b16 %v902, %v899
        %v1173 = vpack.c.b16 %v903, %v900
        %v1174 = vpack.c.b16 %v904, %v901
        %v1175 = vpack.c.b16 %v908, %v905
        %v1176 = vpack.c.b16 %v909, %v906
        %v1177 = vpack.c.b16 %v910, %v907
        %v1178 = vpack.c.b16 %v914, %v911
        %v1179 = vpack.c.b16 %v915, %v912
        %v1180 = vpack.c.b16 %v916, %v913
        %v1181 = vpack.c.b16 %v920, %v917
        %v1182 = vpack.c.b16 %v921, %v918
        %v1183 = vpack.c.b16 %v922, %v919
        %v1184 = vpack.c.b16 %v926, %v923
        %v1185 = vpack.c.b16 %v927, %v924
        %v1186 = vpack.c.b16 %v928, %v925
        %v1187 = vpack.c.b16 %v932, %v929
        %v1188 = vpack.c.b16 %v933, %v930
        %v1189 = vpack.c.b16 %v934, %v931
        %v1190 = vpack.c.b16 %v938, %v935
        %v1191 = vpack.c.b16 %v939, %v936
        %v1192 = vpack.c.b16 %v940, %v937
        %v1193 = vpack.c.b16 %v944, %v941
        %v1194 = vpack.c.b16 %v945, %v942
        %v1195 = vpack.c.b16 %v946, %v943
        %v1196 = vpack.c.b16 %v950, %v947
        %v1197 = vpack.c.b16 %v951, %v948
        %v1198 = vpack.c.b16 %v952, %v949
        %v1199 = vpack.c.b16 %v956, %v953
        %v1200 = vpack.c.b16 %v957, %v954
        %v1201 = vpack.c.b16 %v958, %v955
        %v1202 = vpack.c.b16 %v962, %v959
        %v1203 = vpack.c.b16 %v963, %v960
        %v1204 = vpack.c.b16 %v964, %v961
        %v1205 = vpack.c.b16 %v968, %v965
        %v1206 = vpack.c.b16 %v969, %v966
        %v1207 = vpack.c.b16 %v970, %v967
        %v1208 = vpack.c.b16 %v974, %v971
        %v1209 = vpack.c.b16 %v975, %v972
        %v1210 = vpack.c.b16 %v976, %v973
        %v1211 = vpack.c.b16 %v980, %v977
        %v1212 = vpack.c.b16 %v981, %v978
        %v1213 = vpack.c.b16 %v982, %v979
        %v1214 = vpack.c.b16 %v986, %v983
        %v1215 = vpack.c.b16 %v987, %v984
        %v1216 = vpack.c.b16 %v988, %v985
        %v1217 = vpack.c.b16 %v992, %v989
        %v1218 = vpack.c.b16 %v993, %v990
        %v1219 = vpack.c.b16 %v994, %v991
        %v1220 = vpack.c.b16 %v998, %v995
        %v1221 = vpack.c.b16 %v999, %v996
        %v1222 = vpack.c.b16 %v1000, %v997
        %v1223 = vpack.c.b16 %v1004, %v1001
        %v1224 = vpack.c.b16 %v1005, %v1002
        %v1225 = vpack.c.b16 %v1006, %v1003
        %v1226 = vpack.c.b16 %v1010, %v1007
        %v1227 = vpack.c.b16 %v1011, %v1008
        %v1228 = vpack.c.b16 %v1012, %v1009
        %v1229 = vpack.c.b16 %v1016, %v1013
        %v1230 = vpack.c.b16 %v1017, %v1014
        %v1231 = vpack.c.b16 %v1018, %v1015
        %v1232 = vpack.c.b16 %v1022, %v1019
        %v1233 = vpack.c.b16 %v1023, %v1020
        %v1234 = vpack.c.b16 %v1024, %v1021
        %v1235 = vpack.c.b16 %v1028, %v1025
        %v1236 = vpack.c.b16 %v1029, %v1026
        %v1237 = vpack.c.b16 %v1030, %v1027
        %v1238 = vpack.c.b16 %v1034, %v1031
        %v1239 = vpack.c.b16 %v1035, %v1032
        %v1240 = vpack.c.b16 %v1036, %v1033
        %v1241 = vpack.c.b16 %v1040, %v1037
        %v1242 = vpack.c.b16 %v1041, %v1038
        %v1243 = vpack.c.b16 %v1042, %v1039
        %v1244 = vpack.c.b16 %v1046, %v1043
        %v1245 = vpack.c.b16 %v1047, %v1044
        %v1246 = vpack.c.b16 %v1048, %v1045
        %v1247 = vpack.c.b16 %v1052, %v1049
        %v1248 = vpack.c.b16 %v1053, %v1050
        %v1249 = vpack.c.b16 %v1054, %v1051
        %v1250 = vpack.c.b16 %v1058, %v1055
        %v1251 = vpack.c.b16 %v1059, %v1056
        %v1252 = vpack.c.b16 %v1060, %v1057
        %v1253 = vpack.c.b16 %v1064, %v1061
        %v1254 = vpack.c.b16 %v1065, %v1062
        %v1255 = vpack.c.b16 %v1066, %v1063
        %v1256 = vpack.c.b16 %v1070, %v1067
        %v1257 = vpack.c.b16 %v1071, %v1068
        %v1258 = vpack.c.b16 %v1072, %v1069
        %v1259 = vpack.c.b16 %v1076, %v1073
        %v1260 = vpack.c.b16 %v1077, %v1074
        %v1261 = vpack.c.b16 %v1078, %v1075
        %v1262 = vpack.c.b16 %v1082, %v1079
        %v1263 = vpack.c.b16 %v1083, %v1080
        %v1264 = vpack.c.b16 %v1084, %v1081
        %v1265 = vpack.c.b16 %v1088, %v1085
        %v1266 = vpack.c.b16 %v1089, %v1086
        %v1267 = vpack.c.b16 %v1090, %v1087
        %v1268 = vpack.c.b16 %v1094, %v1091
        %v1269 = vpack.c.b16 %v1095, %v1092
        %v1270 = vpack.c.b16 %v1096, %v1093
        %v1271 = vpack.c.b16 %v1100, %v1097
        %v1272 = vpack.c.b16 %v1101, %v1098
        %v1273 = vpack.c.b16 %v1102, %v1099
        %v1274 = vpack.c.b16 %v1106, %v1103
        %v1275 = vpack.c.b16 %v1107, %v1104
        %v1276 = vpack.c.b16 %v1108, %v1105
        %v1277 = vpack.c.b16 %v1112, %v1109
        %v1278 = vpack.c.b16 %v1113, %v1110
        %v1279 = vpack.c.b16 %v1114, %v1111
        %v1280 = vpack.c.b16 %v1118, %v1115
        %v1281 = vpack.c.b16 %v1119, %v1116
        %v1282 = vpack.c.b16 %v1120, %v1117
        %v1283 = vpack.c.b16 %v1124, %v1121
        %v1284 = vpack.c.b16 %v1125, %v1122
        %v1285 = vpack.c.b16 %v1126, %v1123
        %v1286 = vpack.c.b16 %v1130, %v1127
        %v1287 = vpack.c.b16 %v1131, %v1128
        %v1288 = vpack.c.b16 %v1132, %v1129
        %v1289 = vpack.c.b16 %v1136, %v1133
        %v1290 = vpack.c.b16 %v1137, %v1134
        %v1291 = vpack.c.b16 %v1138, %v1135
        %v1292 = vpack.c.b16 %v1142, %v1139
        %v1293 = vpack.c.b16 %v1143, %v1140
        %v1294 = vpack.c.b16 %v1144, %v1141
        %v1295 = vpack.c.b16 %v1148, %v1145
        %v1296 = vpack.c.b16 %v1149, %v1146
        %v1297 = vpack.c.b16 %v1150, %v1147
        %v1298 = vpack.c.b16 %v1154, %v1151
        %v1299 = vpack.c.b16 %v1155, %v1152
        %v1300 = vpack.c.b16 %v1156, %v1153
        %1445 = vmatpush.bf16.msra.mxu0 %v1178
        %1446 = vmatpush.bf16.msra.mxu0 %v1175
        %1447 = vmatpush.bf16.msra.mxu0 %v1172
        %1448 = vmatpush.bf16.msra.mxu0 %v1169
        %1449 = vmatpush.bf16.msra.mxu0 %v1166
        %1450 = vmatpush.bf16.msra.mxu0 %v1163
        %1451 = vmatpush.bf16.msra.mxu0 %v1160
        %1452 = vmatpush.bf16.msra.mxu0 %v1157
        %1453 = vmatmul.bf16.gmra.mxu0 %v665
        %v1454 = vpop.f32.mrf.mxu0
        %v1455 = vadd.f32 %v641, %v1454
        %v1456 = vpop.f32.mrf.mxu0
        %v1457 = vadd.f32 %v641, %v1456
        %1458 = vdwg.mxu0
        %1459 = vmatpush.bf16.msra.mxu0 %v1202
        %1460 = vmatpush.bf16.msra.mxu0 %v1199
        %1461 = vmatpush.bf16.msra.mxu0 %v1196
        %1462 = vmatpush.bf16.msra.mxu0 %v1193
        %1463 = vmatpush.bf16.msra.mxu0 %v1190
        %1464 = vmatpush.bf16.msra.mxu0 %v1187
        %1465 = vmatpush.bf16.msra.mxu0 %v1184
        %1466 = vmatpush.bf16.msra.mxu0 %v1181
        %1467 = vmatmul.bf16.gmra.mxu0 %v666
        %v1468 = vpop.f32.mrf.mxu0
        %v1469 = vadd.f32 %v1455, %v1468
        %v1470 = vpop.f32.mrf.mxu0
        %v1471 = vadd.f32 %v1457, %v1470
        %1472 = vdwg.mxu0
        %1473 = vmatpush.bf16.msra.mxu0 %v1226
        %1474 = vmatpush.bf16.msra.mxu0 %v1223
        %1475 = vmatpush.bf16.msra.mxu0 %v1220
        %1476 = vmatpush.bf16.msra.mxu0 %v1217
        %1477 = vmatpush.bf16.msra.mxu0 %v1214
        %1478 = vmatpush.bf16.msra.mxu0 %v1211
        %1479 = vmatpush.bf16.msra.mxu0 %v1208
        %1480 = vmatpush.bf16.msra.mxu0 %v1205
        %1481 = vmatmul.bf16.gmra.mxu0 %v667
        %v1482 = vpop.f32.mrf.mxu0
        %v1483 = vadd.f32 %v1469, %v1482
        %v1484 = vpop.f32.mrf.mxu0
        %v1485 = vadd.f32 %v1471, %v1484
        %1486 = vdwg.mxu0
        %1487 = vmatpush.bf16.msra.mxu0 %v1250
        %1488 = vmatpush.bf16.msra.mxu0 %v1247
        %1489 = vmatpush.bf16.msra.mxu0 %v1244
        %1490 = vmatpush.bf16.msra.mxu0 %v1241
        %1491 = vmatpush.bf16.msra.mxu0 %v1238
        %1492 = vmatpush.bf16.msra.mxu0 %v1235
        %1493 = vmatpush.bf16.msra.mxu0 %v1232
        %1494 = vmatpush.bf16.msra.mxu0 %v1229
        %1495 = vmatmul.bf16.gmra.mxu0 %v668
        %v1496 = vpop.f32.mrf.mxu0
        %v1497 = vadd.f32 %v1483, %v1496
        %v1498 = vpop.f32.mrf.mxu0
        %v1499 = vadd.f32 %v1485, %v1498
        %1500 = vdwg.mxu0
        %1501 = vmatpush.bf16.msra.mxu0 %v1274
        %1502 = vmatpush.bf16.msra.mxu0 %v1271
        %1503 = vmatpush.bf16.msra.mxu0 %v1268
        %1504 = vmatpush.bf16.msra.mxu0 %v1265
        %1505 = vmatpush.bf16.msra.mxu0 %v1262
        %1506 = vmatpush.bf16.msra.mxu0 %v1259
        %1507 = vmatpush.bf16.msra.mxu0 %v1256
        %1508 = vmatpush.bf16.msra.mxu0 %v1253
        %1509 = vmatmul.bf16.gmra.mxu0 %v669
        %v1510 = vpop.f32.mrf.mxu0
        %v1511 = vadd.f32 %v1497, %v1510
        %v1512 = vpop.f32.mrf.mxu0
        %v1513 = vadd.f32 %v1499, %v1512
        %1514 = vdwg.mxu0
        %1515 = vmatpush.bf16.msra.mxu0 %v1298
        %1516 = vmatpush.bf16.msra.mxu0 %v1295
        %1517 = vmatpush.bf16.msra.mxu0 %v1292
        %1518 = vmatpush.bf16.msra.mxu0 %v1289
        %1519 = vmatpush.bf16.msra.mxu0 %v1286
        %1520 = vmatpush.bf16.msra.mxu0 %v1283
        %1521 = vmatpush.bf16.msra.mxu0 %v1280
        %1522 = vmatpush.bf16.msra.mxu0 %v1277
        %1523 = vmatmul.bf16.gmra.mxu0 %v670
        %v1524 = vpop.f32.mrf.mxu0
        %v1525 = vadd.f32 %v1511, %v1524
        %v1526 = vpop.f32.mrf.mxu0
        %v1527 = vadd.f32 %v1513, %v1526
        %1528 = vdwg.mxu0
        %1529 = vmatpush.bf16.msra.mxu0 %v1179
        %1530 = vmatpush.bf16.msra.mxu0 %v1176
        %1531 = vmatpush.bf16.msra.mxu0 %v1173
        %1532 = vmatpush.bf16.msra.mxu0 %v1170
        %1533 = vmatpush.bf16.msra.mxu0 %v1167
        %1534 = vmatpush.bf16.msra.mxu0 %v1164
        %1535 = vmatpush.bf16.msra.mxu0 %v1161
        %1536 = vmatpush.bf16.msra.mxu0 %v1158
        %1537 = vmatmul.bf16.gmra.mxu0 %v665
        %v1538 = vpop.f32.mrf.mxu0
        %v1539 = vadd.f32 %v642, %v1538
        %v1540 = vpop.f32.mrf.mxu0
        %v1541 = vadd.f32 %v642, %v1540
        %1542 = vdwg.mxu0
        %1543 = vmatpush.bf16.msra.mxu0 %v1203
        %1544 = vmatpush.bf16.msra.mxu0 %v1200
        %1545 = vmatpush.bf16.msra.mxu0 %v1197
        %1546 = vmatpush.bf16.msra.mxu0 %v1194
        %1547 = vmatpush.bf16.msra.mxu0 %v1191
        %1548 = vmatpush.bf16.msra.mxu0 %v1188
        %1549 = vmatpush.bf16.msra.mxu0 %v1185
        %1550 = vmatpush.bf16.msra.mxu0 %v1182
        %1551 = vmatmul.bf16.gmra.mxu0 %v666
        %v1552 = vpop.f32.mrf.mxu0
        %v1553 = vadd.f32 %v1539, %v1552
        %v1554 = vpop.f32.mrf.mxu0
        %v1555 = vadd.f32 %v1541, %v1554
        %1556 = vdwg.mxu0
        %1557 = vmatpush.bf16.msra.mxu0 %v1227
        %1558 = vmatpush.bf16.msra.mxu0 %v1224
        %1559 = vmatpush.bf16.msra.mxu0 %v1221
        %1560 = vmatpush.bf16.msra.mxu0 %v1218
        %1561 = vmatpush.bf16.msra.mxu0 %v1215
        %1562 = vmatpush.bf16.msra.mxu0 %v1212
        %1563 = vmatpush.bf16.msra.mxu0 %v1209
        %1564 = vmatpush.bf16.msra.mxu0 %v1206
        %1565 = vmatmul.bf16.gmra.mxu0 %v667
        %v1566 = vpop.f32.mrf.mxu0
        %v1567 = vadd.f32 %v1553, %v1566
        %v1568 = vpop.f32.mrf.mxu0
        %v1569 = vadd.f32 %v1555, %v1568
        %1570 = vdwg.mxu0
        %1571 = vmatpush.bf16.msra.mxu0 %v1251
        %1572 = vmatpush.bf16.msra.mxu0 %v1248
        %1573 = vmatpush.bf16.msra.mxu0 %v1245
        %1574 = vmatpush.bf16.msra.mxu0 %v1242
        %1575 = vmatpush.bf16.msra.mxu0 %v1239
        %1576 = vmatpush.bf16.msra.mxu0 %v1236
        %1577 = vmatpush.bf16.msra.mxu0 %v1233
        %1578 = vmatpush.bf16.msra.mxu0 %v1230
        %1579 = vmatmul.bf16.gmra.mxu0 %v668
        %v1580 = vpop.f32.mrf.mxu0
        %v1581 = vadd.f32 %v1567, %v1580
        %v1582 = vpop.f32.mrf.mxu0
        %v1583 = vadd.f32 %v1569, %v1582
        %1584 = vdwg.mxu0
        %1585 = vmatpush.bf16.msra.mxu0 %v1275
        %1586 = vmatpush.bf16.msra.mxu0 %v1272
        %1587 = vmatpush.bf16.msra.mxu0 %v1269
        %1588 = vmatpush.bf16.msra.mxu0 %v1266
        %1589 = vmatpush.bf16.msra.mxu0 %v1263
        %1590 = vmatpush.bf16.msra.mxu0 %v1260
        %1591 = vmatpush.bf16.msra.mxu0 %v1257
        %1592 = vmatpush.bf16.msra.mxu0 %v1254
        %1593 = vmatmul.bf16.gmra.mxu0 %v669
        %v1594 = vpop.f32.mrf.mxu0
        %v1595 = vadd.f32 %v1581, %v1594
        %v1596 = vpop.f32.mrf.mxu0
        %v1597 = vadd.f32 %v1583, %v1596
        %1598 = vdwg.mxu0
        %1599 = vmatpush.bf16.msra.mxu0 %v1299
        %1600 = vmatpush.bf16.msra.mxu0 %v1296
        %1601 = vmatpush.bf16.msra.mxu0 %v1293
        %1602 = vmatpush.bf16.msra.mxu0 %v1290
        %1603 = vmatpush.bf16.msra.mxu0 %v1287
        %1604 = vmatpush.bf16.msra.mxu0 %v1284
        %1605 = vmatpush.bf16.msra.mxu0 %v1281
        %1606 = vmatpush.bf16.msra.mxu0 %v1278
        %1607 = vmatmul.bf16.gmra.mxu0 %v670
        %v1608 = vpop.f32.mrf.mxu0
        %v1609 = vadd.f32 %v1595, %v1608
        %v1610 = vpop.f32.mrf.mxu0
        %v1611 = vadd.f32 %v1597, %v1610
        %1612 = vdwg.mxu0
        %1613 = vmatpush.bf16.msra.mxu0 %v1180
        %1614 = vmatpush.bf16.msra.mxu0 %v1177
        %1615 = vmatpush.bf16.msra.mxu0 %v1174
        %1616 = vmatpush.bf16.msra.mxu0 %v1171
        %1617 = vmatpush.bf16.msra.mxu0 %v1168
        %1618 = vmatpush.bf16.msra.mxu0 %v1165
        %1619 = vmatpush.bf16.msra.mxu0 %v1162
        %1620 = vmatpush.bf16.msra.mxu0 %v1159
        %1621 = vmatmul.bf16.gmra.mxu0 %v665
        %v1622 = vpop.f32.mrf.mxu0
        %v1623 = vadd.f32 %v643, %v1622
        %v1624 = vpop.f32.mrf.mxu0
        %v1625 = vadd.f32 %v643, %v1624
        %1626 = vdwg.mxu0
        %1627 = vmatpush.bf16.msra.mxu0 %v1204
        %1628 = vmatpush.bf16.msra.mxu0 %v1201
        %1629 = vmatpush.bf16.msra.mxu0 %v1198
        %1630 = vmatpush.bf16.msra.mxu0 %v1195
        %1631 = vmatpush.bf16.msra.mxu0 %v1192
        %1632 = vmatpush.bf16.msra.mxu0 %v1189
        %1633 = vmatpush.bf16.msra.mxu0 %v1186
        %1634 = vmatpush.bf16.msra.mxu0 %v1183
        %1635 = vmatmul.bf16.gmra.mxu0 %v666
        %v1636 = vpop.f32.mrf.mxu0
        %v1637 = vadd.f32 %v1623, %v1636
        %v1638 = vpop.f32.mrf.mxu0
        %v1639 = vadd.f32 %v1625, %v1638
        %1640 = vdwg.mxu0
        %1641 = vmatpush.bf16.msra.mxu0 %v1228
        %1642 = vmatpush.bf16.msra.mxu0 %v1225
        %1643 = vmatpush.bf16.msra.mxu0 %v1222
        %1644 = vmatpush.bf16.msra.mxu0 %v1219
        %1645 = vmatpush.bf16.msra.mxu0 %v1216
        %1646 = vmatpush.bf16.msra.mxu0 %v1213
        %1647 = vmatpush.bf16.msra.mxu0 %v1210
        %1648 = vmatpush.bf16.msra.mxu0 %v1207
        %1649 = vmatmul.bf16.gmra.mxu0 %v667
        %v1650 = vpop.f32.mrf.mxu0
        %v1651 = vadd.f32 %v1637, %v1650
        %v1652 = vpop.f32.mrf.mxu0
        %v1653 = vadd.f32 %v1639, %v1652
        %1654 = vdwg.mxu0
        %1655 = vmatpush.bf16.msra.mxu0 %v1252
        %1656 = vmatpush.bf16.msra.mxu0 %v1249
        %1657 = vmatpush.bf16.msra.mxu0 %v1246
        %1658 = vmatpush.bf16.msra.mxu0 %v1243
        %1659 = vmatpush.bf16.msra.mxu0 %v1240
        %1660 = vmatpush.bf16.msra.mxu0 %v1237
        %1661 = vmatpush.bf16.msra.mxu0 %v1234
        %1662 = vmatpush.bf16.msra.mxu0 %v1231
        %1663 = vmatmul.bf16.gmra.mxu0 %v668
        %v1664 = vpop.f32.mrf.mxu0
        %v1665 = vadd.f32 %v1651, %v1664
        %v1666 = vpop.f32.mrf.mxu0
        %v1667 = vadd.f32 %v1653, %v1666
        %1668 = vdwg.mxu0
        %1669 = vmatpush.bf16.msra.mxu0 %v1276
        %1670 = vmatpush.bf16.msra.mxu0 %v1273
        %1671 = vmatpush.bf16.msra.mxu0 %v1270
        %1672 = vmatpush.bf16.msra.mxu0 %v1267
        %1673 = vmatpush.bf16.msra.mxu0 %v1264
        %1674 = vmatpush.bf16.msra.mxu0 %v1261
        %1675 = vmatpush.bf16.msra.mxu0 %v1258
        %1676 = vmatpush.bf16.msra.mxu0 %v1255
        %1677 = vmatmul.bf16.gmra.mxu0 %v669
        %v1678 = vpop.f32.mrf.mxu0
        %v1679 = vadd.f32 %v1665, %v1678
        %v1680 = vpop.f32.mrf.mxu0
        %v1681 = vadd.f32 %v1667, %v1680
        %1682 = vdwg.mxu0
        %1683 = vmatpush.bf16.msra.mxu0 %v1300
        %1684 = vmatpush.bf16.msra.mxu0 %v1297
        %1685 = vmatpush.bf16.msra.mxu0 %v1294
        %1686 = vmatpush.bf16.msra.mxu0 %v1291
        %1687 = vmatpush.bf16.msra.mxu0 %v1288
        %1688 = vmatpush.bf16.msra.mxu0 %v1285
        %1689 = vmatpush.bf16.msra.mxu0 %v1282
        %1690 = vmatpush.bf16.msra.mxu0 %v1279
        %1691 = vmatmul.bf16.gmra.mxu0 %v670
        %v1692 = vpop.f32.mrf.mxu0
        %v1693 = vadd.f32 %v1679, %v1692
        %v1694 = vpop.f32.mrf.mxu0
        %v1695 = vadd.f32 %v1681, %v1694
        %1696 = vdwg.mxu0
        %v1697 = vxor.u32 %v1525, 2147483648
        %v1698 = vxor.u32 %v1527, 2147483648
        %v1699 = vmul.f32 %v1697, 1.442695
        %v1700 = vpow.pop %v1699
        %v1701 = vmul.f32 %v1698, 1.442695
        %v1702 = vpow.pop %v1701
        %v1703 = vadd.f32 %v1700, 1.0
        %v1704 = vadd.f32 %v1702, 1.0
        %v1705 = vrcp.pop %v1703
        %v1706 = vmul.f32 %v1703, %v1705
        %v1707 = vsub.f32 1.0, %v1706
        %v1708 = vmul.f32 %v1705, %v1707
        %v1709 = vadd.f32 %v1705, %v1708
        %vm1710 = vweird.f32 %v1703
        %vm1711 = vweird.f32 %v1705
        %vm1712 = vmor %vm1710, %vm1711
        %v1713 = vsel %vm1712, %v1705, %v1709
        %v1714 = vand.u32 2147483647, %v1703
        %vm1715 = vcmp.eq.f32.partialorder %v1714, 8.507059e+37
        %v1716 = vand.u32 %v1703, 2147483648
        %v1717 = vor.u32 1.1754944e-38, %v1716
        %v1718 = vsel %vm1715, %v1717, %v1713
        %v1719 = vmul.f32 1.0, %v1718
        %v1720 = vrcp.pop %v1704
        %v1721 = vmul.f32 %v1704, %v1720
        %v1722 = vsub.f32 1.0, %v1721
        %v1723 = vmul.f32 %v1720, %v1722
        %v1724 = vadd.f32 %v1720, %v1723
        %vm1725 = vweird.f32 %v1704
        %vm1726 = vweird.f32 %v1720
        %vm1727 = vmor %vm1725, %vm1726
        %v1728 = vsel %vm1727, %v1720, %v1724
        %v1729 = vand.u32 2147483647, %v1704
        %vm1730 = vcmp.eq.f32.partialorder %v1729, 8.507059e+37
        %v1731 = vand.u32 %v1704, 2147483648
        %v1732 = vor.u32 1.1754944e-38, %v1731
        %v1733 = vsel %vm1730, %v1732, %v1728
        %v1734 = vmul.f32 1.0, %v1733
        %v1735 = vxor.u32 %v1609, 2147483648
        %v1736 = vxor.u32 %v1611, 2147483648
        %v1737 = vmul.f32 %v1735, 1.442695
        %v1738 = vpow.pop %v1737
        %v1739 = vmul.f32 %v1736, 1.442695
        %v1740 = vpow.pop %v1739
        %v1741 = vadd.f32 %v1738, 1.0
        %v1742 = vadd.f32 %v1740, 1.0
        %v1743 = vrcp.pop %v1741
        %v1744 = vmul.f32 %v1741, %v1743
        %v1745 = vsub.f32 1.0, %v1744
        %v1746 = vmul.f32 %v1743, %v1745
        %v1747 = vadd.f32 %v1743, %v1746
        %vm1748 = vweird.f32 %v1741
        %vm1749 = vweird.f32 %v1743
        %vm1750 = vmor %vm1748, %vm1749
        %v1751 = vsel %vm1750, %v1743, %v1747
        %v1752 = vand.u32 2147483647, %v1741
        %vm1753 = vcmp.eq.f32.partialorder %v1752, 8.507059e+37
        %v1754 = vand.u32 %v1741, 2147483648
        %v1755 = vor.u32 1.1754944e-38, %v1754
        %v1756 = vsel %vm1753, %v1755, %v1751
        %v1757 = vmul.f32 1.0, %v1756
        %v1758 = vrcp.pop %v1742
        %v1759 = vmul.f32 %v1742, %v1758
        %v1760 = vsub.f32 1.0, %v1759
        %v1761 = vmul.f32 %v1758, %v1760
        %v1762 = vadd.f32 %v1758, %v1761
        %vm1763 = vweird.f32 %v1742
        %vm1764 = vweird.f32 %v1758
        %vm1765 = vmor %vm1763, %vm1764
        %v1766 = vsel %vm1765, %v1758, %v1762
        %v1767 = vand.u32 2147483647, %v1742
        %vm1768 = vcmp.eq.f32.partialorder %v1767, 8.507059e+37
        %v1769 = vand.u32 %v1742, 2147483648
        %v1770 = vor.u32 1.1754944e-38, %v1769
        %v1771 = vsel %vm1768, %v1770, %v1766
        %v1772 = vmul.f32 1.0, %v1771
        %v1773 = vmul.f32 %v326, %v1757
        %v1774 = vmul.f32 %v327, %v1772
        %v1775 = vpack.c.bf16 %v1773, %v1773
        %v1776 = vpack.c.bf16 %v1774, %v1774
        %1777 = vst [vmem:[#allocation6] sm:$0xf] %v1775
        %1778 = vst [vmem:[#allocation6 + $0xc] sm:$0xf] %v1776
        %v1781 = vunpack.c.l.b16 %v1775
        %v1782 = vunpack.c.l.b16 %v1776
        %v1783 = vpack.c.b16 %v1782, %v1781
        %1785 = vmatpush.bf16.msra.mxu0 0
        %1786 = vmatpush.bf16.msra.mxu0 0
        %1787 = vmatpush.bf16.msra.mxu0 0
        %1788 = vmatpush.bf16.msra.mxu0 0
        %1789 = vmatpush.bf16.msra.mxu0 0
        %1790 = vmatpush.bf16.msra.mxu0 0
        %1791 = vmatpush.bf16.msra.mxu0 0
        %1792 = vmatpush.bf16.msra.mxu0 %v1783
        %1793 = vmatmul.bf16.gmra.mxu0 %v353
        %v1794 = vpop.f32.mrf.mxu0
        %v1795 = vadd.f32 0.0, %v1794
        %v1796 = vpop.f32.mrf.mxu0
        %v1797 = vadd.f32 0.0, %v1796
        %1798 = vdwg.mxu0
        %v1799 = vmul.f32 %v1795, 0.5
        %v1800 = vmul.f32 %v1797, 0.5
        %v1801 = vpack.c.bf16 %v1799, %v1799
        %v1802 = vpack.c.bf16 %v1800, %v1800
        %1803 = vst [vmem:[#allocation6 + $0x4] sm:$0xf] %v1801
        %1804 = vst [vmem:[#allocation6 + $0x10] sm:$0xf] %v1802
        %v1807 = vunpack.c.l.b16 %v1801
        %v1808 = vunpack.c.l.b16 %v1802
        %v1809 = vpack.c.b16 %v1808, %v1807
        %1811 = vmatpush.bf16.msra.mxu0 0
        %1812 = vmatpush.bf16.msra.mxu0 0
        %1813 = vmatpush.bf16.msra.mxu0 0
        %1814 = vmatpush.bf16.msra.mxu0 0
        %1815 = vmatpush.bf16.msra.mxu0 0
        %1816 = vmatpush.bf16.msra.mxu0 0
        %1817 = vmatpush.bf16.msra.mxu0 0
        %1818 = vmatpush.bf16.msra.mxu0 %v1809
        %1819 = vmatmul.bf16.gmra.mxu0 %v353
        %v1820 = vpop.f32.mrf.mxu0
        %v1821 = vadd.f32 0.0, %v1820
        %v1822 = vpop.f32.mrf.mxu0
        %v1823 = vadd.f32 0.0, %v1822
        %1824 = vdwg.mxu0
        %v1825 = vunpack.c.l.bf16 %v1775
        %v1826 = vunpack.c.l.bf16 %v1776
        %v1827 = vsub.f32 %v1821, %v1825
        %v1828 = vsub.f32 %v1823, %v1826
        %v1829 = vpack.c.bf16 %v1827, %v1827
        %v1830 = vpack.c.bf16 %v1828, %v1828
        %1831 = vst [vmem:[#allocation6 + $0x8] sm:$0xf] %v1829
        %1832 = vst [vmem:[#allocation6 + $0x14] sm:$0xf] %v1830
        %v1833 = vld [vmem:[#allocation6] sm:$0xff]
        %v1834 = vld [vmem:[#allocation6 + $0x8] sm:$0xf]
        %v1835 = vld [vmem:[#allocation6 + $0xc] sm:$0xff]
        %v1836 = vld [vmem:[#allocation6 + $0x14] sm:$0xf]
        %v1837 = vld [vmem:[#allocation13] sm:$0xf]
        %v1838 = vld [vmem:[#allocation13 + $0x4] sm:$0xf]
        %v1839 = vld [vmem:[#allocation13 + $0x8] sm:$0xf]
        %v1840 = vld [vmem:[#allocation13 + $0xc] sm:$0xf]
        %v1841 = vld [vmem:[#allocation13 + $0x10] sm:$0xf]
        %v1842 = vld [vmem:[#allocation13 + $0x14] sm:$0xf]
        %v1843 = vld [vmem:[#allocation13 + $0x18] sm:$0xf]
        %v1844 = vld [vmem:[#allocation13 + $0x1c] sm:$0xf]
        %v1845 = vld [vmem:[#allocation13 + $0x20] sm:$0xf]
        %v1846 = vld [vmem:[#allocation13 + $0x24] sm:$0xf]
        %v1847 = vld [vmem:[#allocation13 + $0x28] sm:$0xf]
        %v1848 = vld [vmem:[#allocation13 + $0x2c] sm:$0xf]
        %v1849 = vld [vmem:[#allocation13 + $0x30] sm:$0xf]
        %v1850 = vld [vmem:[#allocation13 + $0x34] sm:$0xf]
        %v1851 = vld [vmem:[#allocation13 + $0x38] sm:$0xf]
        %v1852 = vld [vmem:[#allocation13 + $0x3c] sm:$0xf]
        %v1853 = vld [vmem:[#allocation13 + $0x40] sm:$0xf]
        %v1854 = vld [vmem:[#allocation13 + $0x44] sm:$0xf]
        %v1855 = vld [vmem:[#allocation13 + $0x48] sm:$0xf]
        %v1856 = vld [vmem:[#allocation13 + $0x4c] sm:$0xf]
        %v1857 = vld [vmem:[#allocation13 + $0x50] sm:$0xf]
        %v1858 = vld [vmem:[#allocation13 + $0x54] sm:$0xf]
        %v1859 = vld [vmem:[#allocation13 + $0x58] sm:$0xf]
        %v1860 = vld [vmem:[#allocation13 + $0x5c] sm:$0xf]
        %v1861 = vld [vmem:[#allocation13 + $0x60] sm:$0xf]
        %v1862 = vld [vmem:[#allocation13 + $0x64] sm:$0xf]
        %v1863 = vld [vmem:[#allocation13 + $0x68] sm:$0xf]
        %v1864 = vld [vmem:[#allocation13 + $0x6c] sm:$0xf]
        %v1865 = vld [vmem:[#allocation13 + $0x70] sm:$0xf]
        %v1866 = vld [vmem:[#allocation13 + $0x74] sm:$0xf]
        %v1867 = vld [vmem:[#allocation13 + $0x78] sm:$0xf]
        %v1868 = vld [vmem:[#allocation13 + $0x7c] sm:$0xf]
        %v1869 = vld [vmem:[#allocation13 + $0x80] sm:$0xf]
        %v1870 = vld [vmem:[#allocation13 + $0x84] sm:$0xf]
        %v1871 = vld [vmem:[#allocation13 + $0x88] sm:$0xf]
        %v1872 = vld [vmem:[#allocation13 + $0x8c] sm:$0xf]
        %v1873 = vld [vmem:[#allocation13 + $0x90] sm:$0xf]
        %v1874 = vld [vmem:[#allocation13 + $0x94] sm:$0xf]
        %v1875 = vld [vmem:[#allocation13 + $0x98] sm:$0xf]
        %v1876 = vld [vmem:[#allocation13 + $0x9c] sm:$0xf]
        %v1877 = vld [vmem:[#allocation13 + $0xa0] sm:$0xf]
        %v1878 = vld [vmem:[#allocation13 + $0xa4] sm:$0xf]
        %v1879 = vld [vmem:[#allocation13 + $0xa8] sm:$0xf]
        %v1880 = vld [vmem:[#allocation13 + $0xac] sm:$0xf]
        %v1881 = vld [vmem:[#allocation13 + $0xb0] sm:$0xf]
        %v1882 = vld [vmem:[#allocation13 + $0xb4] sm:$0xf]
        %v1883 = vld [vmem:[#allocation13 + $0xb8] sm:$0xf]
        %v1884 = vld [vmem:[#allocation13 + $0xbc] sm:$0xf]
        %v1889 = vunpack.c.l.b16 %v1833
        %v1890 = vunpack.c.h.b16 %v1833
        %v1891 = vunpack.c.l.b16 %v1834
        %v1892 = vunpack.c.l.b16 %v1835
        %v1893 = vunpack.c.h.b16 %v1835
        %v1894 = vunpack.c.l.b16 %v1836
        %v1895 = vpack.c.b16 %v1892, %v1889
        %v1896 = vpack.c.b16 %v1893, %v1890
        %v1897 = vpack.c.b16 %v1894, %v1891
        %v1949 = vunpack.c.l.b16 %v1837
        %v1950 = vunpack.c.l.b16 %v1838
        %v1951 = vunpack.c.l.b16 %v1839
        %v1952 = vunpack.c.l.b16 %v1840
        %v1953 = vunpack.c.l.b16 %v1841
        %v1954 = vunpack.c.l.b16 %v1842
        %v1955 = vunpack.c.l.b16 %v1843
        %v1956 = vunpack.c.l.b16 %v1844
        %v1957 = vunpack.c.l.b16 %v1845
        %v1958 = vunpack.c.l.b16 %v1846
        %v1959 = vunpack.c.l.b16 %v1847
        %v1960 = vunpack.c.l.b16 %v1848
        %v1961 = vunpack.c.l.b16 %v1849
        %v1962 = vunpack.c.l.b16 %v1850
        %v1963 = vunpack.c.l.b16 %v1851
        %v1964 = vunpack.c.l.b16 %v1852
        %v1965 = vunpack.c.l.b16 %v1853
        %v1966 = vunpack.c.l.b16 %v1854
        %v1967 = vunpack.c.l.b16 %v1855
        %v1968 = vunpack.c.l.b16 %v1856
        %v1969 = vunpack.c.l.b16 %v1857
        %v1970 = vunpack.c.l.b16 %v1858
        %v1971 = vunpack.c.l.b16 %v1859
        %v1972 = vunpack.c.l.b16 %v1860
        %v1973 = vunpack.c.l.b16 %v1861
        %v1974 = vunpack.c.l.b16 %v1862
        %v1975 = vunpack.c.l.b16 %v1863
        %v1976 = vunpack.c.l.b16 %v1864
        %v1977 = vunpack.c.l.b16 %v1865
        %v1978 = vunpack.c.l.b16 %v1866
        %v1979 = vunpack.c.l.b16 %v1867
        %v1980 = vunpack.c.l.b16 %v1868
        %v1981 = vunpack.c.l.b16 %v1869
        %v1982 = vunpack.c.l.b16 %v1870
        %v1983 = vunpack.c.l.b16 %v1871
        %v1984 = vunpack.c.l.b16 %v1872
        %v1985 = vunpack.c.l.b16 %v1873
        %v1986 = vunpack.c.l.b16 %v1874
        %v1987 = vunpack.c.l.b16 %v1875
        %v1988 = vunpack.c.l.b16 %v1876
        %v1989 = vunpack.c.l.b16 %v1877
        %v1990 = vunpack.c.l.b16 %v1878
        %v1991 = vunpack.c.l.b16 %v1879
        %v1992 = vunpack.c.l.b16 %v1880
        %v1993 = vunpack.c.l.b16 %v1881
        %v1994 = vunpack.c.l.b16 %v1882
        %v1995 = vunpack.c.l.b16 %v1883
        %v1996 = vunpack.c.l.b16 %v1884
        %v1997 = vpack.c.b16 %v1950, %v1949
        %v1998 = vpack.c.b16 %v1952, %v1951
        %v1999 = vpack.c.b16 %v1954, %v1953
        %v2000 = vpack.c.b16 %v1956, %v1955
        %v2001 = vpack.c.b16 %v1958, %v1957
        %v2002 = vpack.c.b16 %v1960, %v1959
        %v2003 = vpack.c.b16 %v1962, %v1961
        %v2004 = vpack.c.b16 %v1964, %v1963
        %v2005 = vpack.c.b16 %v1966, %v1965
        %v2006 = vpack.c.b16 %v1968, %v1967
        %v2007 = vpack.c.b16 %v1970, %v1969
        %v2008 = vpack.c.b16 %v1972, %v1971
        %v2009 = vpack.c.b16 %v1974, %v1973
        %v2010 = vpack.c.b16 %v1976, %v1975
        %v2011 = vpack.c.b16 %v1978, %v1977
        %v2012 = vpack.c.b16 %v1980, %v1979
        %v2013 = vpack.c.b16 %v1982, %v1981
        %v2014 = vpack.c.b16 %v1984, %v1983
        %v2015 = vpack.c.b16 %v1986, %v1985
        %v2016 = vpack.c.b16 %v1988, %v1987
        %v2017 = vpack.c.b16 %v1990, %v1989
        %v2018 = vpack.c.b16 %v1992, %v1991
        %v2019 = vpack.c.b16 %v1994, %v1993
        %v2020 = vpack.c.b16 %v1996, %v1995
        %2045 = vmatpush.bf16.msra.mxu0 %v2004
        %2046 = vmatpush.bf16.msra.mxu0 %v2003
        %2047 = vmatpush.bf16.msra.mxu0 %v2002
        %2048 = vmatpush.bf16.msra.mxu0 %v2001
        %2049 = vmatpush.bf16.msra.mxu0 %v2000
        %2050 = vmatpush.bf16.msra.mxu0 %v1999
        %2051 = vmatpush.bf16.msra.mxu0 %v1998
        %2052 = vmatpush.bf16.msra.mxu0 %v1997
        %2053 = vmatmul.bf16.gmra.mxu0 %v1895
        %v2054 = vpop.f32.mrf.mxu0
        %v2055 = vadd.f32 0.0, %v2054
        %v2056 = vpop.f32.mrf.mxu0
        %v2057 = vadd.f32 0.0, %v2056
        %2058 = vdwg.mxu0
        %2059 = vmatpush.bf16.msra.mxu0 %v2012
        %2060 = vmatpush.bf16.msra.mxu0 %v2011
        %2061 = vmatpush.bf16.msra.mxu0 %v2010
        %2062 = vmatpush.bf16.msra.mxu0 %v2009
        %2063 = vmatpush.bf16.msra.mxu0 %v2008
        %2064 = vmatpush.bf16.msra.mxu0 %v2007
        %2065 = vmatpush.bf16.msra.mxu0 %v2006
        %2066 = vmatpush.bf16.msra.mxu0 %v2005
        %2067 = vmatmul.bf16.gmra.mxu0 %v1896
        %v2068 = vpop.f32.mrf.mxu0
        %v2069 = vadd.f32 %v2055, %v2068
        %v2070 = vpop.f32.mrf.mxu0
        %v2071 = vadd.f32 %v2057, %v2070
        %2072 = vdwg.mxu0
        %2073 = vmatpush.bf16.msra.mxu0 %v2020
        %2074 = vmatpush.bf16.msra.mxu0 %v2019
        %2075 = vmatpush.bf16.msra.mxu0 %v2018
        %2076 = vmatpush.bf16.msra.mxu0 %v2017
        %2077 = vmatpush.bf16.msra.mxu0 %v2016
        %2078 = vmatpush.bf16.msra.mxu0 %v2015
        %2079 = vmatpush.bf16.msra.mxu0 %v2014
        %2080 = vmatpush.bf16.msra.mxu0 %v2013
        %2081 = vmatmul.bf16.gmra.mxu0 %v1897
        %v2082 = vpop.f32.mrf.mxu0
        %v2083 = vadd.f32 %v2069, %v2082
        %v2084 = vpop.f32.mrf.mxu0
        %v2085 = vadd.f32 %v2071, %v2084
        %2086 = vdwg.mxu0
        %v2087 = vadd.f32 %v1693, %v2083
        %v2088 = vadd.f32 %v1695, %v2085
        %v2089 = vtanh.pop %v2087
        %v2090 = vtanh.pop %v2088
        %v2091 = vmul.f32 %v1719, %v326
        %v2092 = vmul.f32 %v1734, %v327
        %v2093 = vsub.f32 1.0, %v1719
        %v2094 = vsub.f32 1.0, %v1734
        %v2095 = vmul.f32 %v2093, %v2089
        %v2096 = vmul.f32 %v2094, %v2090
        %v2097 = vadd.f32 %v2091, %v2095
        %v2098 = vadd.f32 %v2092, %v2096
        %2099 = vst [vmem:[#allocation4] sm:$0xff] %v2097
        %2100 = vst [vmem:[#allocation4 + $0x8] sm:$0xff] %v2098
        %2101 = vst [vmem:[%s295] sm:$0xff] %v2097
        %2102 = vst [vmem:[%s295 + $0x8] sm:$0xff] %v2098
        %s2103 = sand.u32 %s143, 1
        %s2104 = scalar_lea.sflag [#allocation9], %s2103
        %s2105 = sand.u32 %s143, 1
        %s2106 = smul.addr %s2105, 16
        %s2107 = scalar_lea.vmem [#allocation15], %s2106
        // Predicated region
        $region65: #{tpu_custom_call.1} parent=39 // pred_check
          %p2108 = pneg %p153
        $region66: #{tpu_custom_call.1} parent=39 // pred_check_branch
          %2110 = sbr.rel (%p2108) target = $region68
        $region67: #{tpu_custom_call.1} parent=39 // pred_region
          %2112 = vsyncadd %s2104, 0
          %s2113 = smul.addr %s25, 2
          %s2114 = smul.addr %s2113, 8
          %s2115 = scalar_lea.hbm %s6, %s2114
          %s2116 = sshll.u32 %s2107, 4
          %s2117 = int_to_ptr.vmem [resolvable:$true] %s2116
          %s2118 = sshll.u32 %s2115, 4
          %s2119 = int_to_ptr.hbm [resolvable:$true] %s2118
          %2124 = dma.vmem_to_hbm [thread:$0]  %s2117, 256, %s2119, %s2104, 128, 128, 8
        $region68: #{tpu_custom_call.1} parent=39 // pred_fallthru
          _
      $region40: #{tpu_custom_call.1} parent=5 // pred_fallthru
        _
      %p2125 = scmp.le.s32.totalorder 2, %s20
      // Predicated region
      $region69: #{tpu_custom_call.1} parent=5 // pred_check
        %p2126 = pneg %p2125
      $region70: #{tpu_custom_call.1} parent=5 // pred_check_branch
        %2128 = sbr.rel (%p2126) target = $region72
      $region71: #{tpu_custom_call.1} parent=5 // pred_region
        %s2129 = ssub.s32 %s20, 2
        // Predicated region
        $region73: #{tpu_custom_call.1} parent=71 // pred_check
          %p2130 = pneg %p159
        $region74: #{tpu_custom_call.1} parent=71 // pred_check_branch
          %2132 = sbr.rel (%p2130) target = $region76
        $region75: #{tpu_custom_call.1} parent=71 // pred_region
          %s2133 = sand.u32 %s144, 1
          %s2134 = scalar_lea.sflag [#allocation9], %s2133
          %s2135 = sand.u32 %s144, 1
          %s2136 = smul.addr %s2135, 16
          %s2137 = scalar_lea.vmem [#allocation15], %s2136
          %2139 = dma.done %s2134, 256
        $region76: #{tpu_custom_call.1} parent=71 // pred_fallthru
          _
      $region72: #{tpu_custom_call.1} parent=5 // pred_fallthru
        _
    $region6: #{tpu_custom_call.1} parent=1 // loop_footer
      %s24 = sadd.s32 1, %s20
    $region7: #{tpu_custom_call.1} parent=1 // loop_footer_branch
      %19 = sbr.rel target = $region3
    $region8: #{tpu_custom_call.1} parent=1 // loop_exit
      _
    %2140 = vsyncpa [#allocation8], 1
    %s2141 = scalar_lea.sflag [#allocation8], 1
    %2142 = vsyncpa %s2141, 1
    %2143 = vsyncpa [#allocation11], 1
    %2144 = vsyncpa [#allocation14], 1
    %2145 = vsyncpa [#allocation9], 1
    %s2146 = scalar_lea.sflag [#allocation9], 1
    %2147 = vsyncpa %s2146, 1
  %2148 = vsyncmov [#allocation3]
  %s2149 = vpop.sfrf %2148
  %p2150 = scmp.eq.s32.totalorder %s2149, 0
  %p2151 = pneg %p2150
  %2153 = shalt.err (%p2151)

</llo_original>
